<compile_context>
chip_gen: v5e
topology: v5e:2x2
jax: 0.10.0
libtpu: 0.0.40
codegen_flags: <defaults>
</compile_context>

<pallas_src>
import functools

import jax
import jax.numpy as jnp
from jax import lax
from jax.experimental import pallas as pl
from jax.experimental.pallas import tpu as pltpu


def _layer_norm(x, g, b, eps=1e-5):
    # PyTorch nn.LayerNorm semantics (biased variance, affine).
    mu = jnp.mean(x, axis=-1, keepdims=True)
    xc = x - mu
    var = jnp.mean(xc * xc, axis=-1, keepdims=True)
    return xc * lax.rsqrt(var + eps) * g + b


def _transformer_block_kernel(x_ref, ln1g_ref, ln1b_ref, wqkv_ref, wo_ref, bo_ref,
                              ln2g_ref, ln2b_ref, w1_ref, b1_ref, w2_ref, b2_ref,
                              o_ref, *, num_heads, head_sz):
    # x_ref: (T, C) for one batch element (leading batch dim squeezed by BlockSpec).
    x = x_ref[...]                                   # (T, C) float32
    T = x.shape[0]
    D = num_heads * head_sz
    scale = 1.0 / (head_sz ** 0.5)

    # ---- LayerNorm 1 ----
    xn = _layer_norm(x, ln1g_ref[...], ln1b_ref[...])

    # ---- fused QKV projection: one lane-dense MXU matmul (N = 3*D) ----
    qkv = jnp.dot(xn, wqkv_ref[...], preferred_element_type=jnp.float32)  # (T, 3D)
    q = qkv[:, 0:D]
    k = qkv[:, D:2 * D]
    v = qkv[:, 2 * D:3 * D]

    # causal mask (lower triangular)
    row = lax.broadcasted_iota(jnp.int32, (T, T), 0)
    col = lax.broadcasted_iota(jnp.int32, (T, T), 1)
    causal = col <= row

    # ---- per-head masked attention (heads statically unrolled) ----
    head_outs = []
    for h in range(num_heads):
        sl = slice(h * head_sz, (h + 1) * head_sz)
        qh, kh, vh = q[:, sl], k[:, sl], v[:, sl]
        # contract last dims directly: no explicit kh.T (no XLU transpose)
        s = lax.dot_general(qh, kh, (((1,), (1,)), ((), ())),
                            preferred_element_type=jnp.float32) * scale
        s = jnp.where(causal, s, -1e30)              # finite neg: NaN-proof even if padded
        m = jnp.max(s, axis=-1, keepdims=True)
        e = jnp.exp(s - m)
        denom = jnp.sum(e, axis=-1, keepdims=True)
        p = e * pl.reciprocal(denom, approx=True)    # EUP reciprocal instead of VPU divide
        head_outs.append(jnp.dot(p, vh, preferred_element_type=jnp.float32))
    attn = jnp.concatenate(head_outs, axis=-1)       # (T, D)

    # ---- output projection + residual (residual is on the LN1 output, as in the module) ----
    attn = jnp.dot(attn, wo_ref[...], preferred_element_type=jnp.float32) + bo_ref[...]
    x2 = xn + attn

    # ---- LayerNorm 2 + FeedForward + residual ----
    xn2 = _layer_norm(x2, ln2g_ref[...], ln2b_ref[...])
    h1 = jnp.maximum(
        jnp.dot(xn2, w1_ref[...], preferred_element_type=jnp.float32) + b1_ref[...], 0.0)
    ff = jnp.dot(h1, w2_ref[...], preferred_element_type=jnp.float32) + b2_ref[...]
    o_ref[...] = (xn2 + ff).astype(o_ref.dtype)


def transformer_block_forward(x, blk, *, num_heads, head_sz):
    """x: (B, T, C) float32; blk: dict of block parameters. Returns (B, T, C)."""
    B, T, C = x.shape
    D = num_heads * head_sz
    Hf = blk["w1"].shape[1]
    const = lambda b: (0, 0)
    kernel = functools.partial(_transformer_block_kernel,
                               num_heads=num_heads, head_sz=head_sz)
    return pl.pallas_call(
        kernel,
        out_shape=jax.ShapeDtypeStruct((B, T, C), x.dtype),
        grid_spec=pltpu.PrefetchScalarGridSpec(
            num_scalar_prefetch=0,
            grid=(B,),
            in_specs=[
                pl.BlockSpec((pl.Squeezed(), T, C), lambda b: (b, 0, 0)),  # x
                pl.BlockSpec((1, C), const),        # ln1 gamma
                pl.BlockSpec((1, C), const),        # ln1 beta
                pl.BlockSpec((C, 3 * D), const),    # fused Wqkv (resident across grid)
                pl.BlockSpec((D, C), const),        # Wo
                pl.BlockSpec((1, C), const),        # bo
                pl.BlockSpec((1, C), const),        # ln2 gamma
                pl.BlockSpec((1, C), const),        # ln2 beta
                pl.BlockSpec((C, Hf), const),       # W1
                pl.BlockSpec((1, Hf), const),       # b1
                pl.BlockSpec((Hf, C), const),       # W2
                pl.BlockSpec((1, C), const),        # b2
            ],
            out_specs=pl.BlockSpec((pl.Squeezed(), T, C), lambda b: (b, 0, 0)),
        ),
        compiler_params=pltpu.CompilerParams(dimension_semantics=("parallel",)),
    )(x, blk["ln1_g"], blk["ln1_b"], blk["wqkv"], blk["wo"], blk["bo"],
      blk["ln2_g"], blk["ln2_b"], blk["w1"], blk["b1"], blk["w2"], blk["b2"])


def _final_ln_head_kernel(x_ref, lng_ref, lnb_ref, wh_ref, bh_ref, o_ref):
    xn = _layer_norm(x_ref[...], lng_ref[...], lnb_ref[...])
    logits = jnp.dot(xn, wh_ref[...], preferred_element_type=jnp.float32) + bh_ref[...]
    o_ref[...] = logits.astype(o_ref.dtype)


def lm_head_forward(x, lnf_g, lnf_b, w_head, b_head):
    B, T, C = x.shape
    V = w_head.shape[1]
    const = lambda b: (0, 0)
    return pl.pallas_call(
        _final_ln_head_kernel,
        out_shape=jax.ShapeDtypeStruct((B, T, V), x.dtype),
        grid_spec=pltpu.PrefetchScalarGridSpec(
            num_scalar_prefetch=0,
            grid=(B,),
            in_specs=[
                pl.BlockSpec((pl.Squeezed(), T, C), lambda b: (b, 0, 0)),
                pl.BlockSpec((1, C), const),
                pl.BlockSpec((1, C), const),
                pl.BlockSpec((C, V), const),
                pl.BlockSpec((1, V), const),
            ],
            out_specs=pl.BlockSpec((pl.Squeezed(), T, V), lambda b: (b, 0, 0)),
        ),
        compiler_params=pltpu.CompilerParams(dimension_semantics=("parallel",)),
    )(x, lnf_g, lnf_b, w_head, b_head)


def vanilla_transformer_forward(tokens, params, *, num_heads, head_sz):
    """Full VanillaTransformer.forward: tokens (B, T) int32 -> logits (B, T, vocab)."""
    # Embedding gathers done in plain JAX (no clean tiny-scale Pallas gather).
    # NOTE: faithfully replicates the module: pos_embd is indexed by the *token ids*
    # (self.pos_embd(x.int())), so token ids must be < context_sz.
    tok = jnp.take(params["tok_embd"], tokens, axis=0)
    pos = jnp.take(params["pos_embd"], tokens, axis=0)
    x = tok + pos
    for blk in params["blocks"]:
        x = transformer_block_forward(x, blk, num_heads=num_heads, head_sz=head_sz)
    return lm_head_forward(x, params["lnf_g"], params["lnf_b"],
                           params["w_head"], params["b_head"])


# ------------------------- pure-JAX reference (mirrors the PyTorch module) ----------------


def reference_forward(tokens, params, *, num_heads, head_sz):
    def layer_norm(x, g, b, eps=1e-5):
        mu = x.mean(-1, keepdims=True)
        var = ((x - mu) ** 2).mean(-1, keepdims=True)
        return (x - mu) / jnp.sqrt(var + eps) * g + b

    H = head_sz
    D = num_heads * head_sz
    tok = jnp.take(params["tok_embd"], tokens, axis=0)
    pos = jnp.take(params["pos_embd"], tokens, axis=0)
    x = tok + pos
    T = x.shape[1]
    mask = jnp.tril(jnp.ones((T, T)))
    for blk in params["blocks"]:
        xn = layer_norm(x, blk["ln1_g"], blk["ln1_b"])
        qkv = xn @ blk["wqkv"]
        q, k, v = qkv[..., :D], qkv[..., D:2 * D], qkv[..., 2 * D:]
        outs = []
        for h in range(num_heads):
            sl = slice(h * H, (h + 1) * H)
            qh, kh, vh = q[..., sl], k[..., sl], v[..., sl]
            w = (qh @ jnp.swapaxes(kh, -2, -1)) / (H ** 0.5)
            w = jnp.where(mask == 0, -jnp.inf, w)
            w = jax.nn.softmax(w, axis=-1)
            outs.append(w @ vh)
        attn = jnp.concatenate(outs, axis=-1) @ blk["wo"] + blk["bo"]
        x = xn + attn
        xn2 = layer_norm(x, blk["ln2_g"], blk["ln2_b"])
        ff = jnp.maximum(xn2 @ blk["w1"] + blk["b1"], 0.0) @ blk["w2"] + blk["b2"]
        x = xn2 + ff
    xn = layer_norm(x, params["lnf_g"], params["lnf_b"])
    return xn @ params["w_head"] + params["b_head"]


# ------------------------- parameter construction ----------------------------------------


def init_params(key, *, vocab_sz, context_sz, embd_dim, num_heads, head_sz, num_blocks):
    C = embd_dim
    D = num_heads * head_sz
    Hf = 4 * C
    keys = jax.random.split(key, 3 + num_blocks)

    def lin(k, fi, fo):
        return jax.random.normal(k, (fi, fo), jnp.float32) * (1.0 / (fi ** 0.5))

    params = {
        "tok_embd": jax.random.normal(keys[0], (vocab_sz, C), jnp.float32),
        "pos_embd": jax.random.normal(keys[1], (context_sz, C), jnp.float32),
        "blocks": [],
    }
    for i in range(num_blocks):
        bk = jax.random.split(keys[2 + i], 11)
        params["blocks"].append({
            "ln1_g": 1.0 + 0.1 * jax.random.normal(bk[0], (1, C), jnp.float32),
            "ln1_b": 0.1 * jax.random.normal(bk[1], (1, C), jnp.float32),
            "wqkv": lin(bk[2], C, 3 * D),
            "wo": lin(bk[3], D, C),
            "bo": 0.1 * jax.random.normal(bk[4], (1, C), jnp.float32),
            "ln2_g": 1.0 + 0.1 * jax.random.normal(bk[5], (1, C), jnp.float32),
            "ln2_b": 0.1 * jax.random.normal(bk[6], (1, C), jnp.float32),
            "w1": lin(bk[7], C, Hf),
            "b1": 0.1 * jax.random.normal(bk[8], (1, Hf), jnp.float32),
            "w2": lin(bk[9], Hf, C),
            "b2": 0.1 * jax.random.normal(bk[10], (1, C), jnp.float32),
        })
    fk = jax.random.split(keys[2 + num_blocks], 4)
    params["lnf_g"] = 1.0 + 0.1 * jax.random.normal(fk[0], (1, C), jnp.float32)
    params["lnf_b"] = 0.1 * jax.random.normal(fk[1], (1, C), jnp.float32)
    params["w_head"] = lin(fk[2], C, vocab_sz)
    params["b_head"] = 0.1 * jax.random.normal(fk[3], (1, vocab_sz), jnp.float32)
    return params


if __name__ == "__main__":
    # Small shapes consistent with the module; embd_dim/head fusion chosen so the fused
    # head dim (num_heads*head_sz = 128) and all matmul N dims are lane-dense.
    vocab_sz, context_sz, embd_dim = 256, 8, 128
    num_heads, head_sz, num_blocks = 8, 16, 2
    B, T = 2, context_sz

    key = jax.random.PRNGKey(0)
    kp, kt = jax.random.split(key)
    params = init_params(kp, vocab_sz=vocab_sz, context_sz=context_sz, embd_dim=embd_dim,
                         num_heads=num_heads, head_sz=head_sz, num_blocks=num_blocks)

    # The original module indexes pos_embd with token ids, so ids must lie in [0, context_sz).
    tokens = jax.random.randint(kt, (B, T), 0, context_sz, dtype=jnp.int32)

    logits = vanilla_transformer_forward(tokens, params,
                                         num_heads=num_heads, head_sz=head_sz)
    logits = jax.block_until_ready(logits)

    ref = reference_forward(tokens, params, num_heads=num_heads, head_sz=head_sz)
    assert logits.shape == (B, T, vocab_sz)
    assert jnp.allclose(logits, ref, atol=5e-3, rtol=5e-3), "mismatch vs pure-JAX reference"

    print("KERNEL_OK")
</pallas_src>

<mosaic_0001>
module attributes {stable_mosaic.version = 11 : i64} {
  func.func @_transformer_block_kernel(%arg0: i32, %arg1: memref<1x8x128xf32, #tpu.memory_space<vmem>>, %arg2: memref<1x128xf32, #tpu.memory_space<vmem>>, %arg3: memref<1x128xf32, #tpu.memory_space<vmem>>, %arg4: memref<128x384xf32, #tpu.memory_space<vmem>>, %arg5: memref<128x128xf32, #tpu.memory_space<vmem>>, %arg6: memref<1x128xf32, #tpu.memory_space<vmem>>, %arg7: memref<1x128xf32, #tpu.memory_space<vmem>>, %arg8: memref<1x128xf32, #tpu.memory_space<vmem>>, %arg9: memref<128x512xf32, #tpu.memory_space<vmem>>, %arg10: memref<1x512xf32, #tpu.memory_space<vmem>>, %arg11: memref<512x128xf32, #tpu.memory_space<vmem>>, %arg12: memref<1x128xf32, #tpu.memory_space<vmem>>, %arg13: memref<1x8x128xf32, #tpu.memory_space<vmem>>) attributes {dimension_semantics = [#tpu.dimension_semantics<parallel>], iteration_bounds = array<i64: 2>, scalar_prefetch = 0 : i64, scratch_operands = 0 : i64, tpu.core_type = #tpu.core_type<tc>, window_params = [{transform_indices = @transform_0, window_bounds = array<i64: 1, 8, 128>}, {pipeline_mode = #tpu.pipeline_mode<synchronous>, transform_indices = @transform_1, window_bounds = array<i64: 1, 128>}, {pipeline_mode = #tpu.pipeline_mode<synchronous>, transform_indices = @transform_2, window_bounds = array<i64: 1, 128>}, {pipeline_mode = #tpu.pipeline_mode<synchronous>, transform_indices = @transform_3, window_bounds = array<i64: 128, 384>}, {pipeline_mode = #tpu.pipeline_mode<synchronous>, transform_indices = @transform_4, window_bounds = array<i64: 128, 128>}, {pipeline_mode = #tpu.pipeline_mode<synchronous>, transform_indices = @transform_5, window_bounds = array<i64: 1, 128>}, {pipeline_mode = #tpu.pipeline_mode<synchronous>, transform_indices = @transform_6, window_bounds = array<i64: 1, 128>}, {pipeline_mode = #tpu.pipeline_mode<synchronous>, transform_indices = @transform_7, window_bounds = array<i64: 1, 128>}, {pipeline_mode = #tpu.pipeline_mode<synchronous>, transform_indices = @transform_8, window_bounds = array<i64: 128, 512>}, {pipeline_mode = #tpu.pipeline_mode<synchronous>, transform_indices = @transform_9, window_bounds = array<i64: 1, 512>}, {pipeline_mode = #tpu.pipeline_mode<synchronous>, transform_indices = @transform_10, window_bounds = array<i64: 512, 128>}, {pipeline_mode = #tpu.pipeline_mode<synchronous>, transform_indices = @transform_11, window_bounds = array<i64: 1, 128>}, {transform_indices = @transform_12, window_bounds = array<i64: 1, 8, 128>}]} {
    %c0 = arith.constant 0 : index
    %c0_0 = arith.constant 0 : index
    %c0_1 = arith.constant 0 : index
    %0 = vector.load %arg1[%c0, %c0_0, %c0_1] : memref<1x8x128xf32, #tpu.memory_space<vmem>>, vector<1x8x128xf32>
    %1 = vector.shape_cast %0 : vector<1x8x128xf32> to vector<8x128xf32>
    %c0_2 = arith.constant 0 : index
    %c0_3 = arith.constant 0 : index
    %2 = vector.load %arg2[%c0_2, %c0_3] : memref<1x128xf32, #tpu.memory_space<vmem>>, vector<1x128xf32>
    %c0_4 = arith.constant 0 : index
    %c0_5 = arith.constant 0 : index
    %3 = vector.load %arg3[%c0_4, %c0_5] : memref<1x128xf32, #tpu.memory_space<vmem>>, vector<1x128xf32>
    %cst = arith.constant dense<0.000000e+00> : vector<8xf32>
    %4 = vector.multi_reduction <add>, %1, %cst [1] : vector<8x128xf32> to vector<8xf32>
    %5 = vector.shape_cast %4 : vector<8xf32> to vector<8x1xf32>
    %cst_6 = arith.constant 1.280000e+02 : f32
    %6 = vector.broadcast %cst_6 : f32 to vector<8x1xf32>
    %7 = arith.divf %5, %6 : vector<8x1xf32>
    %8 = vector.broadcast %7 : vector<8x1xf32> to vector<8x128xf32>
    %9 = arith.subf %1, %8 : vector<8x128xf32>
    %10 = arith.mulf %9, %9 : vector<8x128xf32>
    %cst_7 = arith.constant dense<0.000000e+00> : vector<8xf32>
    %11 = vector.multi_reduction <add>, %10, %cst_7 [1] : vector<8x128xf32> to vector<8xf32>
    %12 = vector.shape_cast %11 : vector<8xf32> to vector<8x1xf32>
    %cst_8 = arith.constant 1.280000e+02 : f32
    %13 = vector.broadcast %cst_8 : f32 to vector<8x1xf32>
    %14 = arith.divf %12, %13 : vector<8x1xf32>
    %cst_9 = arith.constant 9.99999974E-6 : f32
    %15 = vector.broadcast %cst_9 : f32 to vector<8x1xf32>
    %16 = arith.addf %14, %15 : vector<8x1xf32>
    %17 = math.rsqrt %16 : vector<8x1xf32>
    %18 = vector.broadcast %17 : vector<8x1xf32> to vector<8x128xf32>
    %19 = arith.mulf %9, %18 : vector<8x128xf32>
    %20 = vector.broadcast %2 : vector<1x128xf32> to vector<8x128xf32>
    %21 = arith.mulf %19, %20 : vector<8x128xf32>
    %22 = vector.broadcast %3 : vector<1x128xf32> to vector<8x128xf32>
    %23 = arith.addf %21, %22 : vector<8x128xf32>
    %c0_10 = arith.constant 0 : index
    %c0_11 = arith.constant 0 : index
    %24 = vector.load %arg4[%c0_10, %c0_11] : memref<128x384xf32, #tpu.memory_space<vmem>>, vector<128x384xf32>
    %cst_12 = arith.constant dense<0.000000e+00> : vector<8x384xf32>
    %25 = tpu.matmul %23, %24, %cst_12 {dimension_numbers = #tpu.dot_dimension_numbers<[1], [0], [0], [1], [0, 0, 1, 1], [], []>} : vector<8x128xf32>, vector<128x384xf32>, vector<8x384xf32> -> vector<8x384xf32>
    %26 = vector.extract_strided_slice %25 {offsets = [0, 0], sizes = [8, 128], strides = [1, 1]} : vector<8x384xf32> to vector<8x128xf32>
    %27 = vector.extract_strided_slice %25 {offsets = [0, 128], sizes = [8, 128], strides = [1, 1]} : vector<8x384xf32> to vector<8x128xf32>
    %28 = vector.extract_strided_slice %25 {offsets = [0, 256], sizes = [8, 128], strides = [1, 1]} : vector<8x384xf32> to vector<8x128xf32>
    %29 = tpu.iota {dimensions = array<i32: 0>} : vector<8x8xi32>
    %30 = tpu.iota {dimensions = array<i32: 1>} : vector<8x8xi32>
    %31 = arith.cmpi sle, %30, %29 : vector<8x8xi32>
    %32 = vector.extract_strided_slice %26 {offsets = [0, 0], sizes = [8, 16], strides = [1, 1]} : vector<8x128xf32> to vector<8x16xf32>
    %33 = vector.extract_strided_slice %27 {offsets = [0, 0], sizes = [8, 16], strides = [1, 1]} : vector<8x128xf32> to vector<8x16xf32>
    %34 = vector.extract_strided_slice %28 {offsets = [0, 0], sizes = [8, 16], strides = [1, 1]} : vector<8x128xf32> to vector<8x16xf32>
    %cst_13 = arith.constant dense<0.000000e+00> : vector<8x8xf32>
    %35 = tpu.matmul %32, %33, %cst_13 {dimension_numbers = #tpu.dot_dimension_numbers<[1], [1], [0], [0], [0, 0, 1, 0], [], []>} : vector<8x16xf32>, vector<8x16xf32>, vector<8x8xf32> -> vector<8x8xf32>
    %cst_14 = arith.constant 2.500000e-01 : f32
    %36 = vector.broadcast %cst_14 : f32 to vector<8x8xf32>
    %37 = arith.mulf %35, %36 : vector<8x8xf32>
    %cst_15 = arith.constant -1.000000e+30 : f32
    %38 = vector.broadcast %cst_15 : f32 to vector<8x8xf32>
    %39 = arith.select %31, %37, %38 : vector<8x8xi1>, vector<8x8xf32>
    %cst_16 = arith.constant dense<0xFF800000> : vector<8xf32>
    %40 = vector.multi_reduction <maximumf>, %39, %cst_16 [1] : vector<8x8xf32> to vector<8xf32>
    %41 = vector.shape_cast %40 : vector<8xf32> to vector<8x1xf32>
    %42 = vector.broadcast %41 : vector<8x1xf32> to vector<8x8xf32>
    %43 = arith.subf %39, %42 : vector<8x8xf32>
    %44 = math.exp %43 : vector<8x8xf32>
    %cst_17 = arith.constant dense<0.000000e+00> : vector<8xf32>
    %45 = vector.multi_reduction <add>, %44, %cst_17 [1] : vector<8x8xf32> to vector<8xf32>
    %46 = vector.shape_cast %45 : vector<8xf32> to vector<8x1xf32>
    %47 = tpu.reciprocal %46 {approx = true} : vector<8x1xf32> -> vector<8x1xf32>
    %48 = vector.broadcast %47 : vector<8x1xf32> to vector<8x8xf32>
    %49 = arith.mulf %44, %48 : vector<8x8xf32>
    %cst_18 = arith.constant dense<0.000000e+00> : vector<8x16xf32>
    %50 = tpu.matmul %49, %34, %cst_18 {dimension_numbers = #tpu.dot_dimension_numbers<[1], [0], [0], [1], [0, 0, 1, 1], [], []>} : vector<8x8xf32>, vector<8x16xf32>, vector<8x16xf32> -> vector<8x16xf32>
    %51 = vector.extract_strided_slice %26 {offsets = [0, 16], sizes = [8, 16], strides = [1, 1]} : vector<8x128xf32> to vector<8x16xf32>
    %52 = vector.extract_strided_slice %27 {offsets = [0, 16], sizes = [8, 16], strides = [1, 1]} : vector<8x128xf32> to vector<8x16xf32>
    %53 = vector.extract_strided_slice %28 {offsets = [0, 16], sizes = [8, 16], strides = [1, 1]} : vector<8x128xf32> to vector<8x16xf32>
    %cst_19 = arith.constant dense<0.000000e+00> : vector<8x8xf32>
    %54 = tpu.matmul %51, %52, %cst_19 {dimension_numbers = #tpu.dot_dimension_numbers<[1], [1], [0], [0], [0, 0, 1, 0], [], []>} : vector<8x16xf32>, vector<8x16xf32>, vector<8x8xf32> -> vector<8x8xf32>
    %cst_20 = arith.constant 2.500000e-01 : f32
    %55 = vector.broadcast %cst_20 : f32 to vector<8x8xf32>
    %56 = arith.mulf %54, %55 : vector<8x8xf32>
    %cst_21 = arith.constant -1.000000e+30 : f32
    %57 = vector.broadcast %cst_21 : f32 to vector<8x8xf32>
    %58 = arith.select %31, %56, %57 : vector<8x8xi1>, vector<8x8xf32>
    %cst_22 = arith.constant dense<0xFF800000> : vector<8xf32>
    %59 = vector.multi_reduction <maximumf>, %58, %cst_22 [1] : vector<8x8xf32> to vector<8xf32>
    %60 = vector.shape_cast %59 : vector<8xf32> to vector<8x1xf32>
    %61 = vector.broadcast %60 : vector<8x1xf32> to vector<8x8xf32>
    %62 = arith.subf %58, %61 : vector<8x8xf32>
    %63 = math.exp %62 : vector<8x8xf32>
    %cst_23 = arith.constant dense<0.000000e+00> : vector<8xf32>
    %64 = vector.multi_reduction <add>, %63, %cst_23 [1] : vector<8x8xf32> to vector<8xf32>
    %65 = vector.shape_cast %64 : vector<8xf32> to vector<8x1xf32>
    %66 = tpu.reciprocal %65 {approx = true} : vector<8x1xf32> -> vector<8x1xf32>
    %67 = vector.broadcast %66 : vector<8x1xf32> to vector<8x8xf32>
    %68 = arith.mulf %63, %67 : vector<8x8xf32>
    %cst_24 = arith.constant dense<0.000000e+00> : vector<8x16xf32>
    %69 = tpu.matmul %68, %53, %cst_24 {dimension_numbers = #tpu.dot_dimension_numbers<[1], [0], [0], [1], [0, 0, 1, 1], [], []>} : vector<8x8xf32>, vector<8x16xf32>, vector<8x16xf32> -> vector<8x16xf32>
    %70 = vector.extract_strided_slice %26 {offsets = [0, 32], sizes = [8, 16], strides = [1, 1]} : vector<8x128xf32> to vector<8x16xf32>
    %71 = vector.extract_strided_slice %27 {offsets = [0, 32], sizes = [8, 16], strides = [1, 1]} : vector<8x128xf32> to vector<8x16xf32>
    %72 = vector.extract_strided_slice %28 {offsets = [0, 32], sizes = [8, 16], strides = [1, 1]} : vector<8x128xf32> to vector<8x16xf32>
    %cst_25 = arith.constant dense<0.000000e+00> : vector<8x8xf32>
    %73 = tpu.matmul %70, %71, %cst_25 {dimension_numbers = #tpu.dot_dimension_numbers<[1], [1], [0], [0], [0, 0, 1, 0], [], []>} : vector<8x16xf32>, vector<8x16xf32>, vector<8x8xf32> -> vector<8x8xf32>
    %cst_26 = arith.constant 2.500000e-01 : f32
    %74 = vector.broadcast %cst_26 : f32 to vector<8x8xf32>
    %75 = arith.mulf %73, %74 : vector<8x8xf32>
    %cst_27 = arith.constant -1.000000e+30 : f32
    %76 = vector.broadcast %cst_27 : f32 to vector<8x8xf32>
    %77 = arith.select %31, %75, %76 : vector<8x8xi1>, vector<8x8xf32>
    %cst_28 = arith.constant dense<0xFF800000> : vector<8xf32>
    %78 = vector.multi_reduction <maximumf>, %77, %cst_28 [1] : vector<8x8xf32> to vector<8xf32>
    %79 = vector.shape_cast %78 : vector<8xf32> to vector<8x1xf32>
    %80 = vector.broadcast %79 : vector<8x1xf32> to vector<8x8xf32>
    %81 = arith.subf %77, %80 : vector<8x8xf32>
    %82 = math.exp %81 : vector<8x8xf32>
    %cst_29 = arith.constant dense<0.000000e+00> : vector<8xf32>
    %83 = vector.multi_reduction <add>, %82, %cst_29 [1] : vector<8x8xf32> to vector<8xf32>
    %84 = vector.shape_cast %83 : vector<8xf32> to vector<8x1xf32>
    %85 = tpu.reciprocal %84 {approx = true} : vector<8x1xf32> -> vector<8x1xf32>
    %86 = vector.broadcast %85 : vector<8x1xf32> to vector<8x8xf32>
    %87 = arith.mulf %82, %86 : vector<8x8xf32>
    %cst_30 = arith.constant dense<0.000000e+00> : vector<8x16xf32>
    %88 = tpu.matmul %87, %72, %cst_30 {dimension_numbers = #tpu.dot_dimension_numbers<[1], [0], [0], [1], [0, 0, 1, 1], [], []>} : vector<8x8xf32>, vector<8x16xf32>, vector<8x16xf32> -> vector<8x16xf32>
    %89 = vector.extract_strided_slice %26 {offsets = [0, 48], sizes = [8, 16], strides = [1, 1]} : vector<8x128xf32> to vector<8x16xf32>
    %90 = vector.extract_strided_slice %27 {offsets = [0, 48], sizes = [8, 16], strides = [1, 1]} : vector<8x128xf32> to vector<8x16xf32>
    %91 = vector.extract_strided_slice %28 {offsets = [0, 48], sizes = [8, 16], strides = [1, 1]} : vector<8x128xf32> to vector<8x16xf32>
    %cst_31 = arith.constant dense<0.000000e+00> : vector<8x8xf32>
    %92 = tpu.matmul %89, %90, %cst_31 {dimension_numbers = #tpu.dot_dimension_numbers<[1], [1], [0], [0], [0, 0, 1, 0], [], []>} : vector<8x16xf32>, vector<8x16xf32>, vector<8x8xf32> -> vector<8x8xf32>
    %cst_32 = arith.constant 2.500000e-01 : f32
    %93 = vector.broadcast %cst_32 : f32 to vector<8x8xf32>
    %94 = arith.mulf %92, %93 : vector<8x8xf32>
    %cst_33 = arith.constant -1.000000e+30 : f32
    %95 = vector.broadcast %cst_33 : f32 to vector<8x8xf32>
    %96 = arith.select %31, %94, %95 : vector<8x8xi1>, vector<8x8xf32>
    %cst_34 = arith.constant dense<0xFF800000> : vector<8xf32>
    %97 = vector.multi_reduction <maximumf>, %96, %cst_34 [1] : vector<8x8xf32> to vector<8xf32>
    %98 = vector.shape_cast %97 : vector<8xf32> to vector<8x1xf32>
    %99 = vector.broadcast %98 : vector<8x1xf32> to vector<8x8xf32>
    %100 = arith.subf %96, %99 : vector<8x8xf32>
    %101 = math.exp %100 : vector<8x8xf32>
    %cst_35 = arith.constant dense<0.000000e+00> : vector<8xf32>
    %102 = vector.multi_reduction <add>, %101, %cst_35 [1] : vector<8x8xf32> to vector<8xf32>
    %103 = vector.shape_cast %102 : vector<8xf32> to vector<8x1xf32>
    %104 = tpu.reciprocal %103 {approx = true} : vector<8x1xf32> -> vector<8x1xf32>
    %105 = vector.broadcast %104 : vector<8x1xf32> to vector<8x8xf32>
    %106 = arith.mulf %101, %105 : vector<8x8xf32>
    %cst_36 = arith.constant dense<0.000000e+00> : vector<8x16xf32>
    %107 = tpu.matmul %106, %91, %cst_36 {dimension_numbers = #tpu.dot_dimension_numbers<[1], [0], [0], [1], [0, 0, 1, 1], [], []>} : vector<8x8xf32>, vector<8x16xf32>, vector<8x16xf32> -> vector<8x16xf32>
    %108 = vector.extract_strided_slice %26 {offsets = [0, 64], sizes = [8, 16], strides = [1, 1]} : vector<8x128xf32> to vector<8x16xf32>
    %109 = vector.extract_strided_slice %27 {offsets = [0, 64], sizes = [8, 16], strides = [1, 1]} : vector<8x128xf32> to vector<8x16xf32>
    %110 = vector.extract_strided_slice %28 {offsets = [0, 64], sizes = [8, 16], strides = [1, 1]} : vector<8x128xf32> to vector<8x16xf32>
    %cst_37 = arith.constant dense<0.000000e+00> : vector<8x8xf32>
    %111 = tpu.matmul %108, %109, %cst_37 {dimension_numbers = #tpu.dot_dimension_numbers<[1], [1], [0], [0], [0, 0, 1, 0], [], []>} : vector<8x16xf32>, vector<8x16xf32>, vector<8x8xf32> -> vector<8x8xf32>
    %cst_38 = arith.constant 2.500000e-01 : f32
    %112 = vector.broadcast %cst_38 : f32 to vector<8x8xf32>
    %113 = arith.mulf %111, %112 : vector<8x8xf32>
    %cst_39 = arith.constant -1.000000e+30 : f32
    %114 = vector.broadcast %cst_39 : f32 to vector<8x8xf32>
    %115 = arith.select %31, %113, %114 : vector<8x8xi1>, vector<8x8xf32>
    %cst_40 = arith.constant dense<0xFF800000> : vector<8xf32>
    %116 = vector.multi_reduction <maximumf>, %115, %cst_40 [1] : vector<8x8xf32> to vector<8xf32>
    %117 = vector.shape_cast %116 : vector<8xf32> to vector<8x1xf32>
    %118 = vector.broadcast %117 : vector<8x1xf32> to vector<8x8xf32>
    %119 = arith.subf %115, %118 : vector<8x8xf32>
    %120 = math.exp %119 : vector<8x8xf32>
    %cst_41 = arith.constant dense<0.000000e+00> : vector<8xf32>
    %121 = vector.multi_reduction <add>, %120, %cst_41 [1] : vector<8x8xf32> to vector<8xf32>
    %122 = vector.shape_cast %121 : vector<8xf32> to vector<8x1xf32>
    %123 = tpu.reciprocal %122 {approx = true} : vector<8x1xf32> -> vector<8x1xf32>
    %124 = vector.broadcast %123 : vector<8x1xf32> to vector<8x8xf32>
    %125 = arith.mulf %120, %124 : vector<8x8xf32>
    %cst_42 = arith.constant dense<0.000000e+00> : vector<8x16xf32>
    %126 = tpu.matmul %125, %110, %cst_42 {dimension_numbers = #tpu.dot_dimension_numbers<[1], [0], [0], [1], [0, 0, 1, 1], [], []>} : vector<8x8xf32>, vector<8x16xf32>, vector<8x16xf32> -> vector<8x16xf32>
    %127 = vector.extract_strided_slice %26 {offsets = [0, 80], sizes = [8, 16], strides = [1, 1]} : vector<8x128xf32> to vector<8x16xf32>
    %128 = vector.extract_strided_slice %27 {offsets = [0, 80], sizes = [8, 16], strides = [1, 1]} : vector<8x128xf32> to vector<8x16xf32>
    %129 = vector.extract_strided_slice %28 {offsets = [0, 80], sizes = [8, 16], strides = [1, 1]} : vector<8x128xf32> to vector<8x16xf32>
    %cst_43 = arith.constant dense<0.000000e+00> : vector<8x8xf32>
    %130 = tpu.matmul %127, %128, %cst_43 {dimension_numbers = #tpu.dot_dimension_numbers<[1], [1], [0], [0], [0, 0, 1, 0], [], []>} : vector<8x16xf32>, vector<8x16xf32>, vector<8x8xf32> -> vector<8x8xf32>
    %cst_44 = arith.constant 2.500000e-01 : f32
    %131 = vector.broadcast %cst_44 : f32 to vector<8x8xf32>
    %132 = arith.mulf %130, %131 : vector<8x8xf32>
    %cst_45 = arith.constant -1.000000e+30 : f32
    %133 = vector.broadcast %cst_45 : f32 to vector<8x8xf32>
    %134 = arith.select %31, %132, %133 : vector<8x8xi1>, vector<8x8xf32>
    %cst_46 = arith.constant dense<0xFF800000> : vector<8xf32>
    %135 = vector.multi_reduction <maximumf>, %134, %cst_46 [1] : vector<8x8xf32> to vector<8xf32>
    %136 = vector.shape_cast %135 : vector<8xf32> to vector<8x1xf32>
    %137 = vector.broadcast %136 : vector<8x1xf32> to vector<8x8xf32>
    %138 = arith.subf %134, %137 : vector<8x8xf32>
    %139 = math.exp %138 : vector<8x8xf32>
    %cst_47 = arith.constant dense<0.000000e+00> : vector<8xf32>
    %140 = vector.multi_reduction <add>, %139, %cst_47 [1] : vector<8x8xf32> to vector<8xf32>
    %141 = vector.shape_cast %140 : vector<8xf32> to vector<8x1xf32>
    %142 = tpu.reciprocal %141 {approx = true} : vector<8x1xf32> -> vector<8x1xf32>
    %143 = vector.broadcast %142 : vector<8x1xf32> to vector<8x8xf32>
    %144 = arith.mulf %139, %143 : vector<8x8xf32>
    %cst_48 = arith.constant dense<0.000000e+00> : vector<8x16xf32>
    %145 = tpu.matmul %144, %129, %cst_48 {dimension_numbers = #tpu.dot_dimension_numbers<[1], [0], [0], [1], [0, 0, 1, 1], [], []>} : vector<8x8xf32>, vector<8x16xf32>, vector<8x16xf32> -> vector<8x16xf32>
    %146 = vector.extract_strided_slice %26 {offsets = [0, 96], sizes = [8, 16], strides = [1, 1]} : vector<8x128xf32> to vector<8x16xf32>
    %147 = vector.extract_strided_slice %27 {offsets = [0, 96], sizes = [8, 16], strides = [1, 1]} : vector<8x128xf32> to vector<8x16xf32>
    %148 = vector.extract_strided_slice %28 {offsets = [0, 96], sizes = [8, 16], strides = [1, 1]} : vector<8x128xf32> to vector<8x16xf32>
    %cst_49 = arith.constant dense<0.000000e+00> : vector<8x8xf32>
    %149 = tpu.matmul %146, %147, %cst_49 {dimension_numbers = #tpu.dot_dimension_numbers<[1], [1], [0], [0], [0, 0, 1, 0], [], []>} : vector<8x16xf32>, vector<8x16xf32>, vector<8x8xf32> -> vector<8x8xf32>
    %cst_50 = arith.constant 2.500000e-01 : f32
    %150 = vector.broadcast %cst_50 : f32 to vector<8x8xf32>
    %151 = arith.mulf %149, %150 : vector<8x8xf32>
    %cst_51 = arith.constant -1.000000e+30 : f32
    %152 = vector.broadcast %cst_51 : f32 to vector<8x8xf32>
    %153 = arith.select %31, %151, %152 : vector<8x8xi1>, vector<8x8xf32>
    %cst_52 = arith.constant dense<0xFF800000> : vector<8xf32>
    %154 = vector.multi_reduction <maximumf>, %153, %cst_52 [1] : vector<8x8xf32> to vector<8xf32>
    %155 = vector.shape_cast %154 : vector<8xf32> to vector<8x1xf32>
    %156 = vector.broadcast %155 : vector<8x1xf32> to vector<8x8xf32>
    %157 = arith.subf %153, %156 : vector<8x8xf32>
    %158 = math.exp %157 : vector<8x8xf32>
    %cst_53 = arith.constant dense<0.000000e+00> : vector<8xf32>
    %159 = vector.multi_reduction <add>, %158, %cst_53 [1] : vector<8x8xf32> to vector<8xf32>
    %160 = vector.shape_cast %159 : vector<8xf32> to vector<8x1xf32>
    %161 = tpu.reciprocal %160 {approx = true} : vector<8x1xf32> -> vector<8x1xf32>
    %162 = vector.broadcast %161 : vector<8x1xf32> to vector<8x8xf32>
    %163 = arith.mulf %158, %162 : vector<8x8xf32>
    %cst_54 = arith.constant dense<0.000000e+00> : vector<8x16xf32>
    %164 = tpu.matmul %163, %148, %cst_54 {dimension_numbers = #tpu.dot_dimension_numbers<[1], [0], [0], [1], [0, 0, 1, 1], [], []>} : vector<8x8xf32>, vector<8x16xf32>, vector<8x16xf32> -> vector<8x16xf32>
    %165 = vector.extract_strided_slice %26 {offsets = [0, 112], sizes = [8, 16], strides = [1, 1]} : vector<8x128xf32> to vector<8x16xf32>
    %166 = vector.extract_strided_slice %27 {offsets = [0, 112], sizes = [8, 16], strides = [1, 1]} : vector<8x128xf32> to vector<8x16xf32>
    %167 = vector.extract_strided_slice %28 {offsets = [0, 112], sizes = [8, 16], strides = [1, 1]} : vector<8x128xf32> to vector<8x16xf32>
    %cst_55 = arith.constant dense<0.000000e+00> : vector<8x8xf32>
    %168 = tpu.matmul %165, %166, %cst_55 {dimension_numbers = #tpu.dot_dimension_numbers<[1], [1], [0], [0], [0, 0, 1, 0], [], []>} : vector<8x16xf32>, vector<8x16xf32>, vector<8x8xf32> -> vector<8x8xf32>
    %cst_56 = arith.constant 2.500000e-01 : f32
    %169 = vector.broadcast %cst_56 : f32 to vector<8x8xf32>
    %170 = arith.mulf %168, %169 : vector<8x8xf32>
    %cst_57 = arith.constant -1.000000e+30 : f32
    %171 = vector.broadcast %cst_57 : f32 to vector<8x8xf32>
    %172 = arith.select %31, %170, %171 : vector<8x8xi1>, vector<8x8xf32>
    %cst_58 = arith.constant dense<0xFF800000> : vector<8xf32>
    %173 = vector.multi_reduction <maximumf>, %172, %cst_58 [1] : vector<8x8xf32> to vector<8xf32>
    %174 = vector.shape_cast %173 : vector<8xf32> to vector<8x1xf32>
    %175 = vector.broadcast %174 : vector<8x1xf32> to vector<8x8xf32>
    %176 = arith.subf %172, %175 : vector<8x8xf32>
    %177 = math.exp %176 : vector<8x8xf32>
    %cst_59 = arith.constant dense<0.000000e+00> : vector<8xf32>
    %178 = vector.multi_reduction <add>, %177, %cst_59 [1] : vector<8x8xf32> to vector<8xf32>
    %179 = vector.shape_cast %178 : vector<8xf32> to vector<8x1xf32>
    %180 = tpu.reciprocal %179 {approx = true} : vector<8x1xf32> -> vector<8x1xf32>
    %181 = vector.broadcast %180 : vector<8x1xf32> to vector<8x8xf32>
    %182 = arith.mulf %177, %181 : vector<8x8xf32>
    %cst_60 = arith.constant dense<0.000000e+00> : vector<8x16xf32>
    %183 = tpu.matmul %182, %167, %cst_60 {dimension_numbers = #tpu.dot_dimension_numbers<[1], [0], [0], [1], [0, 0, 1, 1], [], []>} : vector<8x8xf32>, vector<8x16xf32>, vector<8x16xf32> -> vector<8x16xf32>
    %184 = tpu.concatenate %50, %69, %88, %107, %126, %145, %164, %183 in 1 : vector<8x16xf32>, vector<8x16xf32>, vector<8x16xf32>, vector<8x16xf32>, vector<8x16xf32>, vector<8x16xf32>, vector<8x16xf32>, vector<8x16xf32> -> vector<8x128xf32>
    %c0_61 = arith.constant 0 : index
    %c0_62 = arith.constant 0 : index
    %185 = vector.load %arg5[%c0_61, %c0_62] : memref<128x128xf32, #tpu.memory_space<vmem>>, vector<128x128xf32>
    %cst_63 = arith.constant dense<0.000000e+00> : vector<8x128xf32>
    %186 = tpu.matmul %184, %185, %cst_63 {dimension_numbers = #tpu.dot_dimension_numbers<[1], [0], [0], [1], [0, 0, 1, 1], [], []>} : vector<8x128xf32>, vector<128x128xf32>, vector<8x128xf32> -> vector<8x128xf32>
    %c0_64 = arith.constant 0 : index
    %c0_65 = arith.constant 0 : index
    %187 = vector.load %arg6[%c0_64, %c0_65] : memref<1x128xf32, #tpu.memory_space<vmem>>, vector<1x128xf32>
    %188 = vector.broadcast %187 : vector<1x128xf32> to vector<8x128xf32>
    %189 = arith.addf %186, %188 : vector<8x128xf32>
    %190 = arith.addf %23, %189 : vector<8x128xf32>
    %c0_66 = arith.constant 0 : index
    %c0_67 = arith.constant 0 : index
    %191 = vector.load %arg7[%c0_66, %c0_67] : memref<1x128xf32, #tpu.memory_space<vmem>>, vector<1x128xf32>
    %c0_68 = arith.constant 0 : index
    %c0_69 = arith.constant 0 : index
    %192 = vector.load %arg8[%c0_68, %c0_69] : memref<1x128xf32, #tpu.memory_space<vmem>>, vector<1x128xf32>
    %cst_70 = arith.constant dense<0.000000e+00> : vector<8xf32>
    %193 = vector.multi_reduction <add>, %190, %cst_70 [1] : vector<8x128xf32> to vector<8xf32>
    %194 = vector.shape_cast %193 : vector<8xf32> to vector<8x1xf32>
    %cst_71 = arith.constant 1.280000e+02 : f32
    %195 = vector.broadcast %cst_71 : f32 to vector<8x1xf32>
    %196 = arith.divf %194, %195 : vector<8x1xf32>
    %197 = vector.broadcast %196 : vector<8x1xf32> to vector<8x128xf32>
    %198 = arith.subf %190, %197 : vector<8x128xf32>
    %199 = arith.mulf %198, %198 : vector<8x128xf32>
    %cst_72 = arith.constant dense<0.000000e+00> : vector<8xf32>
    %200 = vector.multi_reduction <add>, %199, %cst_72 [1] : vector<8x128xf32> to vector<8xf32>
    %201 = vector.shape_cast %200 : vector<8xf32> to vector<8x1xf32>
    %cst_73 = arith.constant 1.280000e+02 : f32
    %202 = vector.broadcast %cst_73 : f32 to vector<8x1xf32>
    %203 = arith.divf %201, %202 : vector<8x1xf32>
    %cst_74 = arith.constant 9.99999974E-6 : f32
    %204 = vector.broadcast %cst_74 : f32 to vector<8x1xf32>
    %205 = arith.addf %203, %204 : vector<8x1xf32>
    %206 = math.rsqrt %205 : vector<8x1xf32>
    %207 = vector.broadcast %206 : vector<8x1xf32> to vector<8x128xf32>
    %208 = arith.mulf %198, %207 : vector<8x128xf32>
    %209 = vector.broadcast %191 : vector<1x128xf32> to vector<8x128xf32>
    %210 = arith.mulf %208, %209 : vector<8x128xf32>
    %211 = vector.broadcast %192 : vector<1x128xf32> to vector<8x128xf32>
    %212 = arith.addf %210, %211 : vector<8x128xf32>
    %c0_75 = arith.constant 0 : index
    %c0_76 = arith.constant 0 : index
    %213 = vector.load %arg9[%c0_75, %c0_76] : memref<128x512xf32, #tpu.memory_space<vmem>>, vector<128x512xf32>
    %cst_77 = arith.constant dense<0.000000e+00> : vector<8x512xf32>
    %214 = tpu.matmul %212, %213, %cst_77 {dimension_numbers = #tpu.dot_dimension_numbers<[1], [0], [0], [1], [0, 0, 1, 1], [], []>} : vector<8x128xf32>, vector<128x512xf32>, vector<8x512xf32> -> vector<8x512xf32>
    %c0_78 = arith.constant 0 : index
    %c0_79 = arith.constant 0 : index
    %215 = vector.load %arg10[%c0_78, %c0_79] : memref<1x512xf32, #tpu.memory_space<vmem>>, vector<1x512xf32>
    %216 = vector.broadcast %215 : vector<1x512xf32> to vector<8x512xf32>
    %217 = arith.addf %214, %216 : vector<8x512xf32>
    %cst_80 = arith.constant 0.000000e+00 : f32
    %218 = vector.broadcast %cst_80 : f32 to vector<8x512xf32>
    %219 = arith.maximumf %217, %218 : vector<8x512xf32>
    %c0_81 = arith.constant 0 : index
    %c0_82 = arith.constant 0 : index
    %220 = vector.load %arg11[%c0_81, %c0_82] : memref<512x128xf32, #tpu.memory_space<vmem>>, vector<512x128xf32>
    %cst_83 = arith.constant dense<0.000000e+00> : vector<8x128xf32>
    %221 = tpu.matmul %219, %220, %cst_83 {dimension_numbers = #tpu.dot_dimension_numbers<[1], [0], [0], [1], [0, 0, 1, 1], [], []>} : vector<8x512xf32>, vector<512x128xf32>, vector<8x128xf32> -> vector<8x128xf32>
    %c0_84 = arith.constant 0 : index
    %c0_85 = arith.constant 0 : index
    %222 = vector.load %arg12[%c0_84, %c0_85] : memref<1x128xf32, #tpu.memory_space<vmem>>, vector<1x128xf32>
    %223 = vector.broadcast %222 : vector<1x128xf32> to vector<8x128xf32>
    %224 = arith.addf %221, %223 : vector<8x128xf32>
    %225 = arith.addf %212, %224 : vector<8x128xf32>
    %c0_86 = arith.constant 0 : index
    %c0_87 = arith.constant 0 : index
    %c0_88 = arith.constant 0 : index
    %226 = vector.load %arg13[%c0_86, %c0_87, %c0_88] : memref<1x8x128xf32, #tpu.memory_space<vmem>>, vector<1x8x128xf32>
    %227 = vector.shape_cast %226 : vector<1x8x128xf32> to vector<8x128xf32>
    %228 = vector.shape_cast %225 : vector<8x128xf32> to vector<1x8x128xf32>
    tpu.vector_store %arg13[%c0_86, %c0_87, %c0_88], %228 {strides = array<i32>} : memref<1x8x128xf32, #tpu.memory_space<vmem>>, vector<1x8x128xf32>,
    return
  }
  func.func @transform_0(%arg0: i32) -> (i32, i32, i32) {
    %c0_i32 = arith.constant 0 : i32
    %c0_i32_0 = arith.constant 0 : i32
    %c0_i32_1 = arith.constant 0 : i32
    return %arg0, %c0_i32, %c0_i32_0 : i32, i32, i32
  }
  func.func @transform_1(%arg0: i32) -> (i32, i32) {
    %c0_i32 = arith.constant 0 : i32
    %c0_i32_0 = arith.constant 0 : i32
    %c0_i32_1 = arith.constant 0 : i32
    return %c0_i32, %c0_i32_0 : i32, i32
  }
  func.func @transform_2(%arg0: i32) -> (i32, i32) {
    %c0_i32 = arith.constant 0 : i32
    %c0_i32_0 = arith.constant 0 : i32
    %c0_i32_1 = arith.constant 0 : i32
    return %c0_i32, %c0_i32_0 : i32, i32
  }
  func.func @transform_3(%arg0: i32) -> (i32, i32) {
    %c0_i32 = arith.constant 0 : i32
    %c0_i32_0 = arith.constant 0 : i32
    %c0_i32_1 = arith.constant 0 : i32
    return %c0_i32, %c0_i32_0 : i32, i32
  }
  func.func @transform_4(%arg0: i32) -> (i32, i32) {
    %c0_i32 = arith.constant 0 : i32
    %c0_i32_0 = arith.constant 0 : i32
    %c0_i32_1 = arith.constant 0 : i32
    return %c0_i32, %c0_i32_0 : i32, i32
  }
  func.func @transform_5(%arg0: i32) -> (i32, i32) {
    %c0_i32 = arith.constant 0 : i32
    %c0_i32_0 = arith.constant 0 : i32
    %c0_i32_1 = arith.constant 0 : i32
    return %c0_i32, %c0_i32_0 : i32, i32
  }
  func.func @transform_6(%arg0: i32) -> (i32, i32) {
    %c0_i32 = arith.constant 0 : i32
    %c0_i32_0 = arith.constant 0 : i32
    %c0_i32_1 = arith.constant 0 : i32
    return %c0_i32, %c0_i32_0 : i32, i32
  }
  func.func @transform_7(%arg0: i32) -> (i32, i32) {
    %c0_i32 = arith.constant 0 : i32
    %c0_i32_0 = arith.constant 0 : i32
    %c0_i32_1 = arith.constant 0 : i32
    return %c0_i32, %c0_i32_0 : i32, i32
  }
  func.func @transform_8(%arg0: i32) -> (i32, i32) {
    %c0_i32 = arith.constant 0 : i32
    %c0_i32_0 = arith.constant 0 : i32
    %c0_i32_1 = arith.constant 0 : i32
    return %c0_i32, %c0_i32_0 : i32, i32
  }
  func.func @transform_9(%arg0: i32) -> (i32, i32) {
    %c0_i32 = arith.constant 0 : i32
    %c0_i32_0 = arith.constant 0 : i32
    %c0_i32_1 = arith.constant 0 : i32
    return %c0_i32, %c0_i32_0 : i32, i32
  }
  func.func @transform_10(%arg0: i32) -> (i32, i32) {
    %c0_i32 = arith.constant 0 : i32
    %c0_i32_0 = arith.constant 0 : i32
    %c0_i32_1 = arith.constant 0 : i32
    return %c0_i32, %c0_i32_0 : i32, i32
  }
  func.func @transform_11(%arg0: i32) -> (i32, i32) {
    %c0_i32 = arith.constant 0 : i32
    %c0_i32_0 = arith.constant 0 : i32
    %c0_i32_1 = arith.constant 0 : i32
    return %c0_i32, %c0_i32_0 : i32, i32
  }
  func.func @transform_12(%arg0: i32) -> (i32, i32, i32) {
    %c0_i32 = arith.constant 0 : i32
    %c0_i32_0 = arith.constant 0 : i32
    %c0_i32_1 = arith.constant 0 : i32
    return %arg0, %c0_i32, %c0_i32_0 : i32, i32, i32
  }
}

</mosaic_0001>

<llo_original>
// kernel: tpu_custom_call.1
$region0: #{tpu_custom_call.1}
  #allocation0 [shape = 'u32[]', space=smem, size = 0x4, offset = 0x4, fixed_abs, tag = 'smem constant byte address 0x4 - core index']
  #allocation1 [shape = 'u32[72,128]{1,0:T(1,128)}', space=vmem, size = 0x9000, scoped, tag = 'internal scratch']
  %s0 = inlined_call_operand.hbm [shape: f32[2,8,128], index: 0, kind: input, shape index: {}]
  %s1 = inlined_call_operand.hbm [shape: f32[1,128], index: 1, kind: input, shape index: {}]
  %s2 = inlined_call_operand.vmem [shape: f32[1,128], index: 2, kind: input, shape index: {}]
  %s3 = inlined_call_operand.hbm [shape: f32[128,384], index: 3, kind: input, shape index: {}]
  %s4 = inlined_call_operand.hbm [shape: f32[128,128], index: 4, kind: input, shape index: {}]
  %s5 = inlined_call_operand.vmem [shape: f32[1,128], index: 5, kind: input, shape index: {}]
  %s6 = inlined_call_operand.vmem [shape: f32[1,128], index: 6, kind: input, shape index: {}]
  %s7 = inlined_call_operand.hbm [shape: f32[1,128], index: 7, kind: input, shape index: {}]
  %s8 = inlined_call_operand.hbm [shape: f32[128,512], index: 8, kind: input, shape index: {}]
  %s9 = inlined_call_operand.vmem [shape: f32[1,512], index: 9, kind: input, shape index: {}]
  %s10 = inlined_call_operand.hbm [shape: f32[512,128], index: 10, kind: input, shape index: {}]
  %s11 = inlined_call_operand.vmem [shape: f32[1,128], index: 11, kind: input, shape index: {}]
  %s12 = inlined_call_operand.hbm [shape: f32[2,8,128], index: 12, kind: output, shape index: {}]
  %s13 = sld [smem:[#allocation0]]
  $region109: #{tpu_custom_call.1} parent=0
    _
  %s15 = ssub.s32 1, %s13
  %s16 = scalar_select 0, %s15, %s13
  $region1: #{tpu_custom_call.1} parent=0
    #allocation2 [shape = 'u8[8192]{0}', space=vmem, size = 0x2000, scoped, tag = 'input window, operand 0']
    #allocation3 [shape = 's32[2]{0}', space=sflag, size = 0x8, scoped, tag = 'scoped memory for tpu_custom_call.1']
    #allocation4 [shape = 's32[2]{0}', space=sflag, size = 0x8, scoped, tag = 'scoped memory for tpu_custom_call.1']
    #allocation5 [shape = 'u8[512]{0}', space=vmem, size = 0x400, scoped, tag = 'input window, operand 1, single buffered']
    #allocation6 [shape = 's32[1]{0}', space=sflag, size = 0x4, scoped, tag = 'scoped memory for tpu_custom_call.1']
    #allocation7 [shape = 'u8[196608]{0}', space=vmem, size = 0x30000, scoped, tag = 'input window, operand 3, single buffered']
    #allocation8 [shape = 'u8[65536]{0}', space=vmem, size = 0x10000, scoped, tag = 'input window, operand 4, single buffered']
    #allocation9 [shape = 's32[1]{0}', space=sflag, size = 0x4, scoped, tag = 'scoped memory for tpu_custom_call.1']
    #allocation10 [shape = 'u8[512]{0}', space=vmem, size = 0x400, scoped, tag = 'input window, operand 7, single buffered']
    #allocation11 [shape = 'u8[262144]{0}', space=vmem, size = 0x40000, scoped, tag = 'input window, operand 8, single buffered']
    #allocation12 [shape = 's32[1]{0}', space=sflag, size = 0x4, scoped, tag = 'scoped memory for tpu_custom_call.1']
    #allocation13 [shape = 'u8[262144]{0}', space=vmem, size = 0x40000, scoped, tag = 'input window, operand 10, single buffered']
    #allocation14 [shape = 'u8[8192]{0}', space=vmem, size = 0x2000, scoped, tag = 'output window, operand 0']
    %17 = vsyncpa [#allocation3], 0
    %s18 = scalar_lea.sflag [#allocation3], 1
    %19 = vsyncpa %s18, 0
    %20 = vsyncpa [#allocation6], 0
    %21 = vsyncpa [#allocation9], 0
    %22 = vsyncpa [#allocation12], 0
    %23 = vsyncpa [#allocation4], 0
    %s24 = scalar_lea.sflag [#allocation4], 1
    %25 = vsyncpa %s24, 0
    loop: start=0, step=1, limit=4
    $region2: #{tpu_custom_call.1} parent=1 // loop_pre_header
      _
    $region3: #{tpu_custom_call.1} parent=1 // loop_header
      %s27 = sphi 0, %s31
      %p28 = scmp.ge.s32.totalorder %s27, 4
      %s37 = sphi 0, %s39
      %s40 = sphi 0, %s37
      %s41 = sphi 0, %s40
      %s57 = sphi 0, %s41
      %s61 = sphi 0, %s61
      %s63 = sphi 0, %s61
      %s64 = sphi 0, %s63
      %s78 = sphi 0, %s64
      %s82 = sphi 0, %s82
      %s84 = sphi 0, %s82
      %s85 = sphi 0, %s84
      %s99 = sphi 0, %s85
      %s103 = sphi 0, %s103
      %s105 = sphi 0, %s103
      %s106 = sphi 0, %s105
      %s120 = sphi 0, %s106
      %s124 = sphi 0, %s124
      %s126 = sphi 0, %s124
      %s127 = sphi 0, %s126
      %s141 = sphi 0, %s127
      %s145 = sphi 0, %s145
      %s147 = sphi 0, %s145
      %s148 = sphi 0, %s147
      %s162 = sphi 0, %s148
      %s166 = sphi 0, %s166
      %s168 = sphi 0, %s166
      %s169 = sphi 0, %s168
      %s183 = sphi 0, %s169
      %s187 = sphi 0, %s187
      %s189 = sphi 0, %s187
      %s190 = sphi 0, %s189
      %s204 = sphi 0, %s190
      %s208 = sphi 0, %s208
      %s210 = sphi 0, %s208
      %s211 = sphi 0, %s210
      %s225 = sphi 0, %s211
      %s229 = sphi 0, %s229
      %s231 = sphi 0, %s229
      %s232 = sphi 0, %s231
      %s246 = sphi 0, %s232
      %s250 = sphi 0, %s250
      %s252 = sphi 0, %s250
      %s253 = sphi 0, %s252
      %s267 = sphi 0, %s253
      %s271 = sphi 0, %s271
      %s273 = sphi 0, %s271
      %s274 = sphi 0, %s273
      %s288 = sphi 0, %s274
      %s294 = sphi 0, %s296
      %s297 = sphi 0, %s294
      %s298 = sphi 0, %s297
      %s314 = sphi 0, %s298
    $region4: #{tpu_custom_call.1} parent=1 // loop_header_branch
      %30 = sbr.rel (%p28) target = $region8
    $region5: #{tpu_custom_call.1} parent=1 // loop_body
      %s32 = ssub.s32 %s27, 1
      %s33 = ssub.s32 %s27, 2
      %s34 = sadd.s32 %s27, 1
      %s35 = ssub.s32 %s27, %s34
      %p36 = scmp.eq.s32.totalorder %s35, 0
      %s38 = sadd.s32 %s37, 1
      %s39 = scalar_select %p36, %s37, %s38
      %p42 = pneg %p36
      %p43 = scmp.eq.s32.totalorder %s27, 1
      %p44 = por %p42, %p43
      %p45 = scmp.ne.s32.totalorder %s37, %s40
      %p46 = scmp.eq.s32.totalorder %s27, 0
      %p47 = por %p45, %p46
      %p48 = scmp.ne.s32.totalorder %s37, %s40
      %p49 = scmp.eq.s32.totalorder %s32, 1
      %p50 = por %p48, %p49
      %p51 = scmp.ne.s32.totalorder %s40, %s41
      %p52 = scmp.eq.s32.totalorder %s32, 0
      %p53 = por %p51, %p52
      %p54 = scmp.ne.s32.totalorder %s40, %s41
      %p55 = scmp.eq.s32.totalorder %s33, 1
      %p56 = por %p54, %p55
      %p58 = scmp.ne.s32.totalorder %s41, %s57
      %p59 = scmp.eq.s32.totalorder %s33, 0
      %p60 = por %p58, %p59
      %s62 = sadd.s32 %s61, 1
      %p65 = scmp.eq.s32.totalorder %s27, 1
      %p66 = scmp.ne.s32.totalorder %s61, %s63
      %p67 = scmp.eq.s32.totalorder %s27, 0
      %p68 = por %p66, %p67
      %p69 = scmp.ne.s32.totalorder %s61, %s63
      %p70 = scmp.eq.s32.totalorder %s32, 1
      %p71 = por %p69, %p70
      %p72 = scmp.ne.s32.totalorder %s63, %s64
      %p73 = scmp.eq.s32.totalorder %s32, 0
      %p74 = por %p72, %p73
      %p75 = scmp.ne.s32.totalorder %s63, %s64
      %p76 = scmp.eq.s32.totalorder %s33, 1
      %p77 = por %p75, %p76
      %p79 = scmp.ne.s32.totalorder %s64, %s78
      %p80 = scmp.eq.s32.totalorder %s33, 0
      %p81 = por %p79, %p80
      %s83 = sadd.s32 %s82, 1
      %p86 = scmp.eq.s32.totalorder %s27, 1
      %p87 = scmp.ne.s32.totalorder %s82, %s84
      %p88 = scmp.eq.s32.totalorder %s27, 0
      %p89 = por %p87, %p88
      %p90 = scmp.ne.s32.totalorder %s82, %s84
      %p91 = scmp.eq.s32.totalorder %s32, 1
      %p92 = por %p90, %p91
      %p93 = scmp.ne.s32.totalorder %s84, %s85
      %p94 = scmp.eq.s32.totalorder %s32, 0
      %p95 = por %p93, %p94
      %p96 = scmp.ne.s32.totalorder %s84, %s85
      %p97 = scmp.eq.s32.totalorder %s33, 1
      %p98 = por %p96, %p97
      %p100 = scmp.ne.s32.totalorder %s85, %s99
      %p101 = scmp.eq.s32.totalorder %s33, 0
      %p102 = por %p100, %p101
      %s104 = sadd.s32 %s103, 1
      %p107 = scmp.eq.s32.totalorder %s27, 1
      %p108 = scmp.ne.s32.totalorder %s103, %s105
      %p109 = scmp.eq.s32.totalorder %s27, 0
      %p110 = por %p108, %p109
      %p111 = scmp.ne.s32.totalorder %s103, %s105
      %p112 = scmp.eq.s32.totalorder %s32, 1
      %p113 = por %p111, %p112
      %p114 = scmp.ne.s32.totalorder %s105, %s106
      %p115 = scmp.eq.s32.totalorder %s32, 0
      %p116 = por %p114, %p115
      %p117 = scmp.ne.s32.totalorder %s105, %s106
      %p118 = scmp.eq.s32.totalorder %s33, 1
      %p119 = por %p117, %p118
      %p121 = scmp.ne.s32.totalorder %s106, %s120
      %p122 = scmp.eq.s32.totalorder %s33, 0
      %p123 = por %p121, %p122
      %s125 = sadd.s32 %s124, 1
      %p128 = scmp.eq.s32.totalorder %s27, 1
      %p129 = scmp.ne.s32.totalorder %s124, %s126
      %p130 = scmp.eq.s32.totalorder %s27, 0
      %p131 = por %p129, %p130
      %p132 = scmp.ne.s32.totalorder %s124, %s126
      %p133 = scmp.eq.s32.totalorder %s32, 1
      %p134 = por %p132, %p133
      %p135 = scmp.ne.s32.totalorder %s126, %s127
      %p136 = scmp.eq.s32.totalorder %s32, 0
      %p137 = por %p135, %p136
      %p138 = scmp.ne.s32.totalorder %s126, %s127
      %p139 = scmp.eq.s32.totalorder %s33, 1
      %p140 = por %p138, %p139
      %p142 = scmp.ne.s32.totalorder %s127, %s141
      %p143 = scmp.eq.s32.totalorder %s33, 0
      %p144 = por %p142, %p143
      %s146 = sadd.s32 %s145, 1
      %p149 = scmp.eq.s32.totalorder %s27, 1
      %p150 = scmp.ne.s32.totalorder %s145, %s147
      %p151 = scmp.eq.s32.totalorder %s27, 0
      %p152 = por %p150, %p151
      %p153 = scmp.ne.s32.totalorder %s145, %s147
      %p154 = scmp.eq.s32.totalorder %s32, 1
      %p155 = por %p153, %p154
      %p156 = scmp.ne.s32.totalorder %s147, %s148
      %p157 = scmp.eq.s32.totalorder %s32, 0
      %p158 = por %p156, %p157
      %p159 = scmp.ne.s32.totalorder %s147, %s148
      %p160 = scmp.eq.s32.totalorder %s33, 1
      %p161 = por %p159, %p160
      %p163 = scmp.ne.s32.totalorder %s148, %s162
      %p164 = scmp.eq.s32.totalorder %s33, 0
      %p165 = por %p163, %p164
      %s167 = sadd.s32 %s166, 1
      %p170 = scmp.eq.s32.totalorder %s27, 1
      %p171 = scmp.ne.s32.totalorder %s166, %s168
      %p172 = scmp.eq.s32.totalorder %s27, 0
      %p173 = por %p171, %p172
      %p174 = scmp.ne.s32.totalorder %s166, %s168
      %p175 = scmp.eq.s32.totalorder %s32, 1
      %p176 = por %p174, %p175
      %p177 = scmp.ne.s32.totalorder %s168, %s169
      %p178 = scmp.eq.s32.totalorder %s32, 0
      %p179 = por %p177, %p178
      %p180 = scmp.ne.s32.totalorder %s168, %s169
      %p181 = scmp.eq.s32.totalorder %s33, 1
      %p182 = por %p180, %p181
      %p184 = scmp.ne.s32.totalorder %s169, %s183
      %p185 = scmp.eq.s32.totalorder %s33, 0
      %p186 = por %p184, %p185
      %s188 = sadd.s32 %s187, 1
      %p191 = scmp.eq.s32.totalorder %s27, 1
      %p192 = scmp.ne.s32.totalorder %s187, %s189
      %p193 = scmp.eq.s32.totalorder %s27, 0
      %p194 = por %p192, %p193
      %p195 = scmp.ne.s32.totalorder %s187, %s189
      %p196 = scmp.eq.s32.totalorder %s32, 1
      %p197 = por %p195, %p196
      %p198 = scmp.ne.s32.totalorder %s189, %s190
      %p199 = scmp.eq.s32.totalorder %s32, 0
      %p200 = por %p198, %p199
      %p201 = scmp.ne.s32.totalorder %s189, %s190
      %p202 = scmp.eq.s32.totalorder %s33, 1
      %p203 = por %p201, %p202
      %p205 = scmp.ne.s32.totalorder %s190, %s204
      %p206 = scmp.eq.s32.totalorder %s33, 0
      %p207 = por %p205, %p206
      %s209 = sadd.s32 %s208, 1
      %p212 = scmp.eq.s32.totalorder %s27, 1
      %p213 = scmp.ne.s32.totalorder %s208, %s210
      %p214 = scmp.eq.s32.totalorder %s27, 0
      %p215 = por %p213, %p214
      %p216 = scmp.ne.s32.totalorder %s208, %s210
      %p217 = scmp.eq.s32.totalorder %s32, 1
      %p218 = por %p216, %p217
      %p219 = scmp.ne.s32.totalorder %s210, %s211
      %p220 = scmp.eq.s32.totalorder %s32, 0
      %p221 = por %p219, %p220
      %p222 = scmp.ne.s32.totalorder %s210, %s211
      %p223 = scmp.eq.s32.totalorder %s33, 1
      %p224 = por %p222, %p223
      %p226 = scmp.ne.s32.totalorder %s211, %s225
      %p227 = scmp.eq.s32.totalorder %s33, 0
      %p228 = por %p226, %p227
      %s230 = sadd.s32 %s229, 1
      %p233 = scmp.eq.s32.totalorder %s27, 1
      %p234 = scmp.ne.s32.totalorder %s229, %s231
      %p235 = scmp.eq.s32.totalorder %s27, 0
      %p236 = por %p234, %p235
      %p237 = scmp.ne.s32.totalorder %s229, %s231
      %p238 = scmp.eq.s32.totalorder %s32, 1
      %p239 = por %p237, %p238
      %p240 = scmp.ne.s32.totalorder %s231, %s232
      %p241 = scmp.eq.s32.totalorder %s32, 0
      %p242 = por %p240, %p241
      %p243 = scmp.ne.s32.totalorder %s231, %s232
      %p244 = scmp.eq.s32.totalorder %s33, 1
      %p245 = por %p243, %p244
      %p247 = scmp.ne.s32.totalorder %s232, %s246
      %p248 = scmp.eq.s32.totalorder %s33, 0
      %p249 = por %p247, %p248
      %s251 = sadd.s32 %s250, 1
      %p254 = scmp.eq.s32.totalorder %s27, 1
      %p255 = scmp.ne.s32.totalorder %s250, %s252
      %p256 = scmp.eq.s32.totalorder %s27, 0
      %p257 = por %p255, %p256
      %p258 = scmp.ne.s32.totalorder %s250, %s252
      %p259 = scmp.eq.s32.totalorder %s32, 1
      %p260 = por %p258, %p259
      %p261 = scmp.ne.s32.totalorder %s252, %s253
      %p262 = scmp.eq.s32.totalorder %s32, 0
      %p263 = por %p261, %p262
      %p264 = scmp.ne.s32.totalorder %s252, %s253
      %p265 = scmp.eq.s32.totalorder %s33, 1
      %p266 = por %p264, %p265
      %p268 = scmp.ne.s32.totalorder %s253, %s267
      %p269 = scmp.eq.s32.totalorder %s33, 0
      %p270 = por %p268, %p269
      %s272 = sadd.s32 %s271, 1
      %p275 = scmp.eq.s32.totalorder %s27, 1
      %p276 = scmp.ne.s32.totalorder %s271, %s273
      %p277 = scmp.eq.s32.totalorder %s27, 0
      %p278 = por %p276, %p277
      %p279 = scmp.ne.s32.totalorder %s271, %s273
      %p280 = scmp.eq.s32.totalorder %s32, 1
      %p281 = por %p279, %p280
      %p282 = scmp.ne.s32.totalorder %s273, %s274
      %p283 = scmp.eq.s32.totalorder %s32, 0
      %p284 = por %p282, %p283
      %p285 = scmp.ne.s32.totalorder %s273, %s274
      %p286 = scmp.eq.s32.totalorder %s33, 1
      %p287 = por %p285, %p286
      %p289 = scmp.ne.s32.totalorder %s274, %s288
      %p290 = scmp.eq.s32.totalorder %s33, 0
      %p291 = por %p289, %p290
      %s292 = ssub.s32 %s27, %s34
      %p293 = scmp.eq.s32.totalorder %s292, 0
      %s295 = sadd.s32 %s294, 1
      %s296 = scalar_select %p293, %s294, %s295
      %p299 = pneg %p293
      %p300 = scmp.eq.s32.totalorder %s27, 1
      %p301 = por %p299, %p300
      %p302 = scmp.ne.s32.totalorder %s294, %s297
      %p303 = scmp.eq.s32.totalorder %s27, 0
      %p304 = por %p302, %p303
      %p305 = scmp.ne.s32.totalorder %s294, %s297
      %p306 = scmp.eq.s32.totalorder %s32, 1
      %p307 = por %p305, %p306
      %p308 = scmp.ne.s32.totalorder %s297, %s298
      %p309 = scmp.eq.s32.totalorder %s32, 0
      %p310 = por %p308, %p309
      %p311 = scmp.ne.s32.totalorder %s297, %s298
      %p312 = scmp.eq.s32.totalorder %s33, 1
      %p313 = por %p311, %p312
      %p315 = scmp.ne.s32.totalorder %s298, %s314
      %p316 = scmp.eq.s32.totalorder %s33, 0
      %p317 = por %p315, %p316
      %p318 = scmp.le.s32.totalorder 1, %s27
      %p319 = scmp.lt.s32.totalorder %s27, 3
      %p320 = pnand %p318, %p319
      %p321 = pneg %p320
      // Predicated region
      $region9: #{tpu_custom_call.1} parent=5 // pred_check
        _
      $region10: #{tpu_custom_call.1} parent=5 // pred_check_branch
        %323 = sbr.rel (%p320) target = $region12
      $region11: #{tpu_custom_call.1} parent=5 // pred_region
        %s324 = ssub.s32 %s27, 1
        // Predicated region
        $region13: #{tpu_custom_call.1} parent=11 // pred_check
          %p325 = pneg %p74
        $region14: #{tpu_custom_call.1} parent=11 // pred_check_branch
          %327 = sbr.rel (%p325) target = $region16
        $region15: #{tpu_custom_call.1} parent=11 // pred_region
          %329 = vsyncadd [#allocation6], 0
          %s331 = sshll.u32 %s1, 4
          %s332 = int_to_ptr.hbm [resolvable:$true] %s331
          %s333 = sshll.u32 [#allocation5], 4
          %s334 = int_to_ptr.vmem [resolvable:$true] %s333
          %336 = dma.hbm_to_vmem [thread:$0]  %s332, 16, %s334, [#allocation6]
        $region16: #{tpu_custom_call.1} parent=11 // pred_fallthru
          _
        // Predicated region
        $region17: #{tpu_custom_call.1} parent=11 // pred_check
          %p337 = pneg %p95
        $region18: #{tpu_custom_call.1} parent=11 // pred_check_branch
          %339 = sbr.rel (%p337) target = $region20
        $region19: #{tpu_custom_call.1} parent=11 // pred_region
          _
        $region20: #{tpu_custom_call.1} parent=11 // pred_fallthru
          _
        // Predicated region
        $region21: #{tpu_custom_call.1} parent=11 // pred_check
          %p340 = pneg %p116
        $region22: #{tpu_custom_call.1} parent=11 // pred_check_branch
          %342 = sbr.rel (%p340) target = $region24
        $region23: #{tpu_custom_call.1} parent=11 // pred_region
          %344 = vsyncadd [#allocation6], 0
          %s345 = sshll.u32 %s3, 4
          %s346 = int_to_ptr.hbm [resolvable:$true] %s345
          %s347 = sshll.u32 [#allocation7], 4
          %s348 = int_to_ptr.vmem [resolvable:$true] %s347
          %353 = dma.hbm_to_vmem [thread:$0]  %s346, 6144, %s348, [#allocation6], 384, 384, 24
        $region24: #{tpu_custom_call.1} parent=11 // pred_fallthru
          _
        // Predicated region
        $region25: #{tpu_custom_call.1} parent=11 // pred_check
          %p354 = pneg %p137
        $region26: #{tpu_custom_call.1} parent=11 // pred_check_branch
          %356 = sbr.rel (%p354) target = $region28
        $region27: #{tpu_custom_call.1} parent=11 // pred_region
          %358 = vsyncadd [#allocation9], 0
          %s359 = sshll.u32 %s4, 4
          %s360 = int_to_ptr.hbm [resolvable:$true] %s359
          %s361 = sshll.u32 [#allocation8], 4
          %s362 = int_to_ptr.vmem [resolvable:$true] %s361
          %367 = dma.hbm_to_vmem [thread:$0]  %s360, 2048, %s362, [#allocation9], 128, 128, 8
        $region28: #{tpu_custom_call.1} parent=11 // pred_fallthru
          _
        // Predicated region
        $region29: #{tpu_custom_call.1} parent=11 // pred_check
          %p368 = pneg %p158
        $region30: #{tpu_custom_call.1} parent=11 // pred_check_branch
          %370 = sbr.rel (%p368) target = $region32
        $region31: #{tpu_custom_call.1} parent=11 // pred_region
          _
        $region32: #{tpu_custom_call.1} parent=11 // pred_fallthru
          _
        // Predicated region
        $region33: #{tpu_custom_call.1} parent=11 // pred_check
          %p371 = pneg %p179
        $region34: #{tpu_custom_call.1} parent=11 // pred_check_branch
          %373 = sbr.rel (%p371) target = $region36
        $region35: #{tpu_custom_call.1} parent=11 // pred_region
          _
        $region36: #{tpu_custom_call.1} parent=11 // pred_fallthru
          _
        // Predicated region
        $region37: #{tpu_custom_call.1} parent=11 // pred_check
          %p374 = pneg %p200
        $region38: #{tpu_custom_call.1} parent=11 // pred_check_branch
          %376 = sbr.rel (%p374) target = $region40
        $region39: #{tpu_custom_call.1} parent=11 // pred_region
          %378 = vsyncadd [#allocation9], 0
          %s380 = sshll.u32 %s7, 4
          %s381 = int_to_ptr.hbm [resolvable:$true] %s380
          %s382 = sshll.u32 [#allocation10], 4
          %s383 = int_to_ptr.vmem [resolvable:$true] %s382
          %385 = dma.hbm_to_vmem [thread:$0]  %s381, 16, %s383, [#allocation9]
        $region40: #{tpu_custom_call.1} parent=11 // pred_fallthru
          _
        // Predicated region
        $region41: #{tpu_custom_call.1} parent=11 // pred_check
          %p386 = pneg %p221
        $region42: #{tpu_custom_call.1} parent=11 // pred_check_branch
          %388 = sbr.rel (%p386) target = $region44
        $region43: #{tpu_custom_call.1} parent=11 // pred_region
          %390 = vsyncadd [#allocation12], 0
          %s391 = sshll.u32 %s8, 4
          %s392 = int_to_ptr.hbm [resolvable:$true] %s391
          %s393 = sshll.u32 [#allocation11], 4
          %s394 = int_to_ptr.vmem [resolvable:$true] %s393
          %399 = dma.hbm_to_vmem [thread:$0]  %s392, 8192, %s394, [#allocation12], 512, 512, 32
        $region44: #{tpu_custom_call.1} parent=11 // pred_fallthru
          _
        // Predicated region
        $region45: #{tpu_custom_call.1} parent=11 // pred_check
          %p400 = pneg %p242
        $region46: #{tpu_custom_call.1} parent=11 // pred_check_branch
          %402 = sbr.rel (%p400) target = $region48
        $region47: #{tpu_custom_call.1} parent=11 // pred_region
          _
        $region48: #{tpu_custom_call.1} parent=11 // pred_fallthru
          _
        // Predicated region
        $region49: #{tpu_custom_call.1} parent=11 // pred_check
          %p403 = pneg %p263
        $region50: #{tpu_custom_call.1} parent=11 // pred_check_branch
          %405 = sbr.rel (%p403) target = $region52
        $region51: #{tpu_custom_call.1} parent=11 // pred_region
          %407 = vsyncadd [#allocation12], 0
          %s408 = sshll.u32 %s10, 4
          %s409 = int_to_ptr.hbm [resolvable:$true] %s408
          %s410 = sshll.u32 [#allocation13], 4
          %s411 = int_to_ptr.vmem [resolvable:$true] %s410
          %416 = dma.hbm_to_vmem [thread:$0]  %s409, 8192, %s411, [#allocation12], 128, 128, 8
        $region52: #{tpu_custom_call.1} parent=11 // pred_fallthru
          _
        // Predicated region
        $region53: #{tpu_custom_call.1} parent=11 // pred_check
          %p417 = pneg %p284
        $region54: #{tpu_custom_call.1} parent=11 // pred_check_branch
          %419 = sbr.rel (%p417) target = $region56
        $region55: #{tpu_custom_call.1} parent=11 // pred_region
          _
        $region56: #{tpu_custom_call.1} parent=11 // pred_fallthru
          _
      $region12: #{tpu_custom_call.1} parent=5 // pred_fallthru
        _
      %p420 = scmp.lt.s32.totalorder %s27, 2
      // Predicated region
      $region57: #{tpu_custom_call.1} parent=5 // pred_check
        %p421 = pneg %p420
      $region58: #{tpu_custom_call.1} parent=5 // pred_check_branch
        %423 = sbr.rel (%p421) target = $region60
      $region59: #{tpu_custom_call.1} parent=5 // pred_region
        // Predicated region
        $region61: #{tpu_custom_call.1} parent=59 // pred_check
          %p424 = pneg %p47
        $region62: #{tpu_custom_call.1} parent=59 // pred_check_branch
          %426 = sbr.rel (%p424) target = $region64
        $region63: #{tpu_custom_call.1} parent=59 // pred_region
          %s427 = sand.u32 %s37, 1
          %s428 = scalar_lea.sflag [#allocation3], %s427
          %s429 = sand.u32 %s37, 1
          %s430 = smul.addr %s429, 8
          %s431 = scalar_lea.vmem [#allocation2], %s430
          %433 = vsyncadd %s428, 0
          %s434 = smul.addr %s27, 8
          %s435 = scalar_lea.hbm %s0, %s434
          %s437 = sshll.u32 %s435, 4
          %s438 = int_to_ptr.hbm [resolvable:$true] %s437
          %s439 = sshll.u32 %s431, 4
          %s440 = int_to_ptr.vmem [resolvable:$true] %s439
          %442 = dma.hbm_to_vmem [thread:$0]  %s438, 128, %s440, %s428
        $region64: #{tpu_custom_call.1} parent=59 // pred_fallthru
          _
      $region60: #{tpu_custom_call.1} parent=5 // pred_fallthru
        _
      %p443 = scmp.le.s32.totalorder 1, %s27
      %p444 = scmp.lt.s32.totalorder %s27, 3
      %p445 = pnand %p443, %p444
      %p446 = pneg %p445
      // Predicated region
      $region65: #{tpu_custom_call.1} parent=5 // pred_check
        _
      $region66: #{tpu_custom_call.1} parent=5 // pred_check_branch
        %448 = sbr.rel (%p445) target = $region68
      $region67: #{tpu_custom_call.1} parent=5 // pred_region
        %s449 = ssub.s32 %s27, 1
        %s450 = sand.u32 %s40, 1
        %s451 = scalar_lea.sflag [#allocation3], %s450
        %s452 = sand.u32 %s40, 1
        %s453 = smul.addr %s452, 8
        %s454 = scalar_lea.vmem [#allocation2], %s453
        // Predicated region
        $region69: #{tpu_custom_call.1} parent=67 // pred_check
          %p455 = pneg %p53
        $region70: #{tpu_custom_call.1} parent=67 // pred_check_branch
          %457 = sbr.rel (%p455) target = $region72
        $region71: #{tpu_custom_call.1} parent=67 // pred_region
          %459 = dma.done %s451, 128
        $region72: #{tpu_custom_call.1} parent=67 // pred_fallthru
          _
        // Predicated region
        $region73: #{tpu_custom_call.1} parent=67 // pred_check
          %p460 = pneg %p74
        $region74: #{tpu_custom_call.1} parent=67 // pred_check_branch
          %462 = sbr.rel (%p460) target = $region76
        $region75: #{tpu_custom_call.1} parent=67 // pred_region
          %464 = dma.done [#allocation6], 16
        $region76: #{tpu_custom_call.1} parent=67 // pred_fallthru
          _
        // Predicated region
        $region77: #{tpu_custom_call.1} parent=67 // pred_check
          %p465 = pneg %p116
        $region78: #{tpu_custom_call.1} parent=67 // pred_check_branch
          %467 = sbr.rel (%p465) target = $region80
        $region79: #{tpu_custom_call.1} parent=67 // pred_region
          %469 = dma.done [#allocation6], 6144
        $region80: #{tpu_custom_call.1} parent=67 // pred_fallthru
          _
        // Predicated region
        $region81: #{tpu_custom_call.1} parent=67 // pred_check
          %p470 = pneg %p137
        $region82: #{tpu_custom_call.1} parent=67 // pred_check_branch
          %472 = sbr.rel (%p470) target = $region84
        $region83: #{tpu_custom_call.1} parent=67 // pred_region
          %474 = dma.done [#allocation9], 2048
        $region84: #{tpu_custom_call.1} parent=67 // pred_fallthru
          _
        // Predicated region
        $region85: #{tpu_custom_call.1} parent=67 // pred_check
          %p475 = pneg %p200
        $region86: #{tpu_custom_call.1} parent=67 // pred_check_branch
          %477 = sbr.rel (%p475) target = $region88
        $region87: #{tpu_custom_call.1} parent=67 // pred_region
          %479 = dma.done [#allocation9], 16
        $region88: #{tpu_custom_call.1} parent=67 // pred_fallthru
          _
        // Predicated region
        $region89: #{tpu_custom_call.1} parent=67 // pred_check
          %p480 = pneg %p221
        $region90: #{tpu_custom_call.1} parent=67 // pred_check_branch
          %482 = sbr.rel (%p480) target = $region92
        $region91: #{tpu_custom_call.1} parent=67 // pred_region
          %484 = dma.done [#allocation12], 8192
        $region92: #{tpu_custom_call.1} parent=67 // pred_fallthru
          _
        // Predicated region
        $region93: #{tpu_custom_call.1} parent=67 // pred_check
          %p485 = pneg %p263
        $region94: #{tpu_custom_call.1} parent=67 // pred_check_branch
          %487 = sbr.rel (%p485) target = $region96
        $region95: #{tpu_custom_call.1} parent=67 // pred_region
          %489 = dma.done [#allocation12], 8192
        $region96: #{tpu_custom_call.1} parent=67 // pred_fallthru
          _
        %s490 = sand.u32 %s40, 1
        %s491 = scalar_lea.sflag [#allocation3], %s490
        %s492 = sand.u32 %s40, 1
        %s493 = smul.addr %s492, 8
        %s494 = scalar_lea.vmem [#allocation2], %s493
        %p495 = pneg %p53
        %p496 = pneg %p50
        %p497 = pneg %p74
        %p498 = pneg %p71
        %p499 = pneg %p95
        %p500 = pneg %p92
        %p501 = pneg %p116
        %p502 = pneg %p113
        %p503 = pneg %p137
        %p504 = pneg %p134
        %p505 = pneg %p158
        %p506 = pneg %p155
        %p507 = pneg %p179
        %p508 = pneg %p176
        %p509 = pneg %p200
        %p510 = pneg %p197
        %p511 = pneg %p221
        %p512 = pneg %p218
        %p513 = pneg %p242
        %p514 = pneg %p239
        %p515 = pneg %p263
        %p516 = pneg %p260
        %p517 = pneg %p284
        %p518 = pneg %p281
        %p519 = pneg %p310
        %p520 = pneg %p307
        %s521 = sand.u32 %s297, 1
        %s522 = scalar_lea.sflag [#allocation4], %s521
        %s523 = sand.u32 %s297, 1
        %s524 = smul.addr %s523, 8
        %s525 = scalar_lea.vmem [#allocation14], %s524
        %v526 = vld [vmem:[%s454] sm:$0xff]
        %v527 = vld [vmem:[#allocation5] sm:$0x1]
        %v528 = vld [vmem:[%s2] sm:$0x1]
        %529 = vadd.xlane.f32.xlu0 %v526
        %v530 = vpop.xlane.xlu0 %529
        %v531 = vrcp.pop 128.0
        %v532 = vmul.f32 128.0, %v531
        %v533 = vsub.f32 1.0, %v532
        %v534 = vmul.f32 %v531, %v533
        %v535 = vadd.f32 %v531, %v534
        %vm536 = vweird.f32 %v531
        %v537 = vsel %vm536, %v531, %v535
        %v538 = vmul.f32 %v530, %v537
        %v539 = vsub.f32 %v526, %v538
        %v540 = vmul.f32 %v539, %v539
        %541 = vadd.xlane.f32.xlu0 %v540
        %v542 = vpop.xlane.xlu0 %541
        %v543 = vmul.f32 %v542, %v537
        %v544 = vadd.f32 %v543, 1e-05
        %v545 = vrsqrt.pop %v544
        %v546 = vmul.f32 %v545, %v544
        %v547 = vmul.f32 %v546, %v545
        %v548 = vmul.f32 0.5, %v547
        %v549 = vsub.f32 1.5, %v548
        %v550 = vmul.f32 %v545, %v549
        %vm551 = vweird.f32 %v544
        %vm552 = vweird.f32 %v545
        %vm553 = vmor %vm551, %vm552
        %v554 = vsel %vm553, %v545, %v550
        %v555 = vmul.f32 %v539, %v554
        %v557 = vperm.slane %v527, 0
        %v559 = vmul.f32 %v555, %v557
        %v561 = vperm.slane %v528, 0
        %v563 = vadd.f32 %v559, %v561
        %v564 = vld [vmem:[#allocation7] sm:$0xff]
        %v565 = vld [vmem:[#allocation7 + $0x8] sm:$0xff]
        %v566 = vld [vmem:[#allocation7 + $0x10] sm:$0xff]
        %v567 = vld [vmem:[#allocation7 + $0x18] sm:$0xff]
        %v568 = vld [vmem:[#allocation7 + $0x20] sm:$0xff]
        %v569 = vld [vmem:[#allocation7 + $0x28] sm:$0xff]
        %v570 = vld [vmem:[#allocation7 + $0x30] sm:$0xff]
        %v571 = vld [vmem:[#allocation7 + $0x38] sm:$0xff]
        %v572 = vld [vmem:[#allocation7 + $0x40] sm:$0xff]
        %v573 = vld [vmem:[#allocation7 + $0x48] sm:$0xff]
        %v574 = vld [vmem:[#allocation7 + $0x50] sm:$0xff]
        %v575 = vld [vmem:[#allocation7 + $0x58] sm:$0xff]
        %v576 = vld [vmem:[#allocation7 + $0x60] sm:$0xff]
        %v577 = vld [vmem:[#allocation7 + $0x68] sm:$0xff]
        %v578 = vld [vmem:[#allocation7 + $0x70] sm:$0xff]
        %v579 = vld [vmem:[#allocation7 + $0x78] sm:$0xff]
        %v580 = vld [vmem:[#allocation7 + $0x80] sm:$0xff]
        %v581 = vld [vmem:[#allocation7 + $0x88] sm:$0xff]
        %v582 = vld [vmem:[#allocation7 + $0x90] sm:$0xff]
        %v583 = vld [vmem:[#allocation7 + $0x98] sm:$0xff]
        %v584 = vld [vmem:[#allocation7 + $0xa0] sm:$0xff]
        %v585 = vld [vmem:[#allocation7 + $0xa8] sm:$0xff]
        %v586 = vld [vmem:[#allocation7 + $0xb0] sm:$0xff]
        %v587 = vld [vmem:[#allocation7 + $0xb8] sm:$0xff]
        %v588 = vld [vmem:[#allocation7 + $0xc0] sm:$0xff]
        %v589 = vld [vmem:[#allocation7 + $0xc8] sm:$0xff]
        %v590 = vld [vmem:[#allocation7 + $0xd0] sm:$0xff]
        %v591 = vld [vmem:[#allocation7 + $0xd8] sm:$0xff]
        %v592 = vld [vmem:[#allocation7 + $0xe0] sm:$0xff]
        %v593 = vld [vmem:[#allocation7 + $0xe8] sm:$0xff]
        %v594 = vld [vmem:[#allocation7 + $0xf0] sm:$0xff]
        %v595 = vld [vmem:[#allocation7 + $0xf8] sm:$0xff]
        %v596 = vld [vmem:[#allocation7 + $0x100] sm:$0xff]
        %v597 = vld [vmem:[#allocation7 + $0x108] sm:$0xff]
        %v598 = vld [vmem:[#allocation7 + $0x110] sm:$0xff]
        %v599 = vld [vmem:[#allocation7 + $0x118] sm:$0xff]
        %v600 = vld [vmem:[#allocation7 + $0x120] sm:$0xff]
        %v601 = vld [vmem:[#allocation7 + $0x128] sm:$0xff]
        %v602 = vld [vmem:[#allocation7 + $0x130] sm:$0xff]
        %v603 = vld [vmem:[#allocation7 + $0x138] sm:$0xff]
        %v604 = vld [vmem:[#allocation7 + $0x140] sm:$0xff]
        %v605 = vld [vmem:[#allocation7 + $0x148] sm:$0xff]
        %v606 = vld [vmem:[#allocation7 + $0x150] sm:$0xff]
        %v607 = vld [vmem:[#allocation7 + $0x158] sm:$0xff]
        %v608 = vld [vmem:[#allocation7 + $0x160] sm:$0xff]
        %v609 = vld [vmem:[#allocation7 + $0x168] sm:$0xff]
        %v610 = vld [vmem:[#allocation7 + $0x170] sm:$0xff]
        %v611 = vld [vmem:[#allocation7 + $0x178] sm:$0xff]
        %612 = vmatpush.msra.mxu0 %v609
        %613 = vmatpush.msra.mxu0 %v606
        %614 = vmatpush.msra.mxu0 %v603
        %615 = vmatpush.msra.mxu0 %v600
        %616 = vmatpush.msra.mxu0 %v597
        %617 = vmatpush.msra.mxu0 %v594
        %618 = vmatpush.msra.mxu0 %v591
        %619 = vmatpush.msra.mxu0 %v588
        %620 = vmatpush.msra.mxu0 %v585
        %621 = vmatpush.msra.mxu0 %v582
        %622 = vmatpush.msra.mxu0 %v579
        %623 = vmatpush.msra.mxu0 %v576
        %624 = vmatpush.msra.mxu0 %v573
        %625 = vmatpush.msra.mxu0 %v570
        %626 = vmatpush.msra.mxu0 %v567
        %627 = vmatpush.msra.mxu0 %v564
        %628 = vmatmul.f32.gmra.mxu0 %v563
        %v629 = vpop.f32.mrf.mxu0
        %v630 = vadd.f32 0.0, %v629
        %631 = vdwg.mxu0
        %632 = vmatpush.msra.mxu0 %v610
        %633 = vmatpush.msra.mxu0 %v607
        %634 = vmatpush.msra.mxu0 %v604
        %635 = vmatpush.msra.mxu0 %v601
        %636 = vmatpush.msra.mxu0 %v598
        %637 = vmatpush.msra.mxu0 %v595
        %638 = vmatpush.msra.mxu0 %v592
        %639 = vmatpush.msra.mxu0 %v589
        %640 = vmatpush.msra.mxu0 %v586
        %641 = vmatpush.msra.mxu0 %v583
        %642 = vmatpush.msra.mxu0 %v580
        %643 = vmatpush.msra.mxu0 %v577
        %644 = vmatpush.msra.mxu0 %v574
        %645 = vmatpush.msra.mxu0 %v571
        %646 = vmatpush.msra.mxu0 %v568
        %647 = vmatpush.msra.mxu0 %v565
        %648 = vmatmul.f32.gmra.mxu0 %v563
        %v649 = vpop.f32.mrf.mxu0
        %v650 = vadd.f32 0.0, %v649
        %651 = vdwg.mxu0
        %652 = vmatpush.msra.mxu0 %v611
        %653 = vmatpush.msra.mxu0 %v608
        %654 = vmatpush.msra.mxu0 %v605
        %655 = vmatpush.msra.mxu0 %v602
        %656 = vmatpush.msra.mxu0 %v599
        %657 = vmatpush.msra.mxu0 %v596
        %658 = vmatpush.msra.mxu0 %v593
        %659 = vmatpush.msra.mxu0 %v590
        %660 = vmatpush.msra.mxu0 %v587
        %661 = vmatpush.msra.mxu0 %v584
        %662 = vmatpush.msra.mxu0 %v581
        %663 = vmatpush.msra.mxu0 %v578
        %664 = vmatpush.msra.mxu0 %v575
        %665 = vmatpush.msra.mxu0 %v572
        %666 = vmatpush.msra.mxu0 %v569
        %667 = vmatpush.msra.mxu0 %v566
        %668 = vmatmul.f32.gmra.mxu0 %v563
        %v669 = vpop.f32.mrf.mxu0
        %v670 = vadd.f32 0.0, %v669
        %671 = vdwg.mxu0
        %v672 = vlaneseq
        %v673 = vshrl.u32 %v672, 7
        %v674 = vlaneseq
        %v675 = vand.u32 %v674, 127
        %vm676 = vcmp.le.s32.totalorder %v675, %v673
        %vm677 = vcmask 130048
        %v679 = vsel %vm677, %v630, 0
        %v682 = vsel %vm677, %v650, 0
        %684 = vmatpush.xpose.msra.mxu0 0.0
        %685 = vmatpush.xpose.msra.mxu0 0.0
        %686 = vmatpush.xpose.msra.mxu0 0.0
        %687 = vmatpush.xpose.msra.mxu0 0.0
        %688 = vmatpush.xpose.msra.mxu0 0.0
        %689 = vmatpush.xpose.msra.mxu0 0.0
        %690 = vmatpush.xpose.msra.mxu0 0.0
        %691 = vmatpush.xpose.msra.mxu0 0.0
        %692 = vmatpush.xpose.msra.mxu0 0.0
        %693 = vmatpush.xpose.msra.mxu0 0.0
        %694 = vmatpush.xpose.msra.mxu0 0.0
        %695 = vmatpush.xpose.msra.mxu0 0.0
        %696 = vmatpush.xpose.msra.mxu0 0.0
        %697 = vmatpush.xpose.msra.mxu0 0.0
        %698 = vmatpush.xpose.msra.mxu0 0.0
        %699 = vmatpush.xpose.msra.mxu0 %v682
        %700 = vmatmul.f32.gmra.mxu0 %v679
        %v701 = vpop.f32.mrf.mxu0
        %v702 = vadd.f32 0.0, %v701
        %703 = vdwg.mxu0
        %v704 = vmul.f32 %v702, 0.25
        %v705 = vsel %vm676, %v704, -1e+30
        %vm706 = vcmask 64512
        %v707 = vsel %vm706, %v705, -inf
        %708 = vmax.xlane.f32.xlu0 %v707
        %v709 = vpop.xlane.xlu0 %708
        %v710 = vsub.f32 %v705, %v709
        %v711 = vmul.f32 %v710, 1.442695
        %v712 = vpow.pop %v711
        %v713 = vsel %vm706, %v712, 0.0
        %714 = vadd.xlane.f32.xlu0 %v713
        %v715 = vpop.xlane.xlu0 %714
        %v716 = vrcp.pop %v715
        %v717 = vmul.f32 %v712, %v716
        %v719 = vsel %vm706, %v717, 0
        %721 = vmatpush.msra.mxu0 0.0
        %722 = vmatpush.msra.mxu0 0.0
        %723 = vmatpush.msra.mxu0 0.0
        %724 = vmatpush.msra.mxu0 0.0
        %725 = vmatpush.msra.mxu0 0.0
        %726 = vmatpush.msra.mxu0 0.0
        %727 = vmatpush.msra.mxu0 0.0
        %728 = vmatpush.msra.mxu0 0.0
        %729 = vmatpush.msra.mxu0 0.0
        %730 = vmatpush.msra.mxu0 0.0
        %731 = vmatpush.msra.mxu0 0.0
        %732 = vmatpush.msra.mxu0 0.0
        %733 = vmatpush.msra.mxu0 0.0
        %734 = vmatpush.msra.mxu0 0.0
        %735 = vmatpush.msra.mxu0 0.0
        %736 = vmatpush.msra.mxu0 %v670
        %737 = vmatmul.f32.gmra.mxu0 %v719
        %v738 = vpop.f32.mrf.mxu0
        %v739 = vadd.f32 0.0, %v738
        %740 = vdwg.mxu0
        %741 = vrot.lane.b32.xlu0 %v630, 112
        %v742 = vpop.permute.xlu0 %741
        %743 = vrot.lane.b32.xlu0 %v650, 112
        %v744 = vpop.permute.xlu0 %743
        %v745 = vsel %vm677, %v742, 0
        %v747 = vsel %vm677, %v744, 0
        %749 = vmatpush.xpose.msra.mxu0 0.0
        %750 = vmatpush.xpose.msra.mxu0 0.0
        %751 = vmatpush.xpose.msra.mxu0 0.0
        %752 = vmatpush.xpose.msra.mxu0 0.0
        %753 = vmatpush.xpose.msra.mxu0 0.0
        %754 = vmatpush.xpose.msra.mxu0 0.0
        %755 = vmatpush.xpose.msra.mxu0 0.0
        %756 = vmatpush.xpose.msra.mxu0 0.0
        %757 = vmatpush.xpose.msra.mxu0 0.0
        %758 = vmatpush.xpose.msra.mxu0 0.0
        %759 = vmatpush.xpose.msra.mxu0 0.0
        %760 = vmatpush.xpose.msra.mxu0 0.0
        %761 = vmatpush.xpose.msra.mxu0 0.0
        %762 = vmatpush.xpose.msra.mxu0 0.0
        %763 = vmatpush.xpose.msra.mxu0 0.0
        %764 = vmatpush.xpose.msra.mxu0 %v747
        %765 = vmatmul.f32.gmra.mxu0 %v745
        %v766 = vpop.f32.mrf.mxu0
        %v767 = vadd.f32 0.0, %v766
        %768 = vdwg.mxu0
        %v769 = vmul.f32 %v767, 0.25
        %v770 = vsel %vm676, %v769, -1e+30
        %v771 = vsel %vm706, %v770, -inf
        %772 = vmax.xlane.f32.xlu0 %v771
        %v773 = vpop.xlane.xlu0 %772
        %v774 = vsub.f32 %v770, %v773
        %v775 = vmul.f32 %v774, 1.442695
        %v776 = vpow.pop %v775
        %v777 = vsel %vm706, %v776, 0.0
        %778 = vadd.xlane.f32.xlu0 %v777
        %v779 = vpop.xlane.xlu0 %778
        %v780 = vrcp.pop %v779
        %v781 = vmul.f32 %v776, %v780
        %783 = vrot.lane.b32.xlu0 %v670, 112
        %v784 = vpop.permute.xlu0 %783
        %v787 = vsel %vm706, %v781, 0
        %789 = vmatpush.msra.mxu0 0.0
        %790 = vmatpush.msra.mxu0 0.0
        %791 = vmatpush.msra.mxu0 0.0
        %792 = vmatpush.msra.mxu0 0.0
        %793 = vmatpush.msra.mxu0 0.0
        %794 = vmatpush.msra.mxu0 0.0
        %795 = vmatpush.msra.mxu0 0.0
        %796 = vmatpush.msra.mxu0 0.0
        %797 = vmatpush.msra.mxu0 0.0
        %798 = vmatpush.msra.mxu0 0.0
        %799 = vmatpush.msra.mxu0 0.0
        %800 = vmatpush.msra.mxu0 0.0
        %801 = vmatpush.msra.mxu0 0.0
        %802 = vmatpush.msra.mxu0 0.0
        %803 = vmatpush.msra.mxu0 0.0
        %804 = vmatpush.msra.mxu0 %v784
        %805 = vmatmul.f32.gmra.mxu0 %v787
        %v806 = vpop.f32.mrf.mxu0
        %v807 = vadd.f32 0.0, %v806
        %808 = vdwg.mxu0
        %809 = vrot.lane.b32.xlu0 %v630, 96
        %v810 = vpop.permute.xlu0 %809
        %811 = vrot.lane.b32.xlu0 %v650, 96
        %v812 = vpop.permute.xlu0 %811
        %v813 = vsel %vm677, %v810, 0
        %v815 = vsel %vm677, %v812, 0
        %817 = vmatpush.xpose.msra.mxu0 0.0
        %818 = vmatpush.xpose.msra.mxu0 0.0
        %819 = vmatpush.xpose.msra.mxu0 0.0
        %820 = vmatpush.xpose.msra.mxu0 0.0
        %821 = vmatpush.xpose.msra.mxu0 0.0
        %822 = vmatpush.xpose.msra.mxu0 0.0
        %823 = vmatpush.xpose.msra.mxu0 0.0
        %824 = vmatpush.xpose.msra.mxu0 0.0
        %825 = vmatpush.xpose.msra.mxu0 0.0
        %826 = vmatpush.xpose.msra.mxu0 0.0
        %827 = vmatpush.xpose.msra.mxu0 0.0
        %828 = vmatpush.xpose.msra.mxu0 0.0
        %829 = vmatpush.xpose.msra.mxu0 0.0
        %830 = vmatpush.xpose.msra.mxu0 0.0
        %831 = vmatpush.xpose.msra.mxu0 0.0
        %832 = vmatpush.xpose.msra.mxu0 %v815
        %833 = vmatmul.f32.gmra.mxu0 %v813
        %v834 = vpop.f32.mrf.mxu0
        %v835 = vadd.f32 0.0, %v834
        %836 = vdwg.mxu0
        %v837 = vmul.f32 %v835, 0.25
        %v838 = vsel %vm676, %v837, -1e+30
        %v839 = vsel %vm706, %v838, -inf
        %840 = vmax.xlane.f32.xlu0 %v839
        %v841 = vpop.xlane.xlu0 %840
        %v842 = vsub.f32 %v838, %v841
        %v843 = vmul.f32 %v842, 1.442695
        %v844 = vpow.pop %v843
        %v845 = vsel %vm706, %v844, 0.0
        %846 = vadd.xlane.f32.xlu0 %v845
        %v847 = vpop.xlane.xlu0 %846
        %v848 = vrcp.pop %v847
        %v849 = vmul.f32 %v844, %v848
        %850 = vrot.lane.b32.xlu0 %v670, 96
        %v851 = vpop.permute.xlu0 %850
        %v854 = vsel %vm706, %v849, 0
        %856 = vmatpush.msra.mxu0 0.0
        %857 = vmatpush.msra.mxu0 0.0
        %858 = vmatpush.msra.mxu0 0.0
        %859 = vmatpush.msra.mxu0 0.0
        %860 = vmatpush.msra.mxu0 0.0
        %861 = vmatpush.msra.mxu0 0.0
        %862 = vmatpush.msra.mxu0 0.0
        %863 = vmatpush.msra.mxu0 0.0
        %864 = vmatpush.msra.mxu0 0.0
        %865 = vmatpush.msra.mxu0 0.0
        %866 = vmatpush.msra.mxu0 0.0
        %867 = vmatpush.msra.mxu0 0.0
        %868 = vmatpush.msra.mxu0 0.0
        %869 = vmatpush.msra.mxu0 0.0
        %870 = vmatpush.msra.mxu0 0.0
        %871 = vmatpush.msra.mxu0 %v851
        %872 = vmatmul.f32.gmra.mxu0 %v854
        %v873 = vpop.f32.mrf.mxu0
        %v874 = vadd.f32 0.0, %v873
        %875 = vdwg.mxu0
        %876 = vrot.lane.b32.xlu0 %v630, 80
        %v877 = vpop.permute.xlu0 %876
        %878 = vrot.lane.b32.xlu0 %v650, 80
        %v879 = vpop.permute.xlu0 %878
        %v880 = vsel %vm677, %v877, 0
        %v882 = vsel %vm677, %v879, 0
        %884 = vmatpush.xpose.msra.mxu0 0.0
        %885 = vmatpush.xpose.msra.mxu0 0.0
        %886 = vmatpush.xpose.msra.mxu0 0.0
        %887 = vmatpush.xpose.msra.mxu0 0.0
        %888 = vmatpush.xpose.msra.mxu0 0.0
        %889 = vmatpush.xpose.msra.mxu0 0.0
        %890 = vmatpush.xpose.msra.mxu0 0.0
        %891 = vmatpush.xpose.msra.mxu0 0.0
        %892 = vmatpush.xpose.msra.mxu0 0.0
        %893 = vmatpush.xpose.msra.mxu0 0.0
        %894 = vmatpush.xpose.msra.mxu0 0.0
        %895 = vmatpush.xpose.msra.mxu0 0.0
        %896 = vmatpush.xpose.msra.mxu0 0.0
        %897 = vmatpush.xpose.msra.mxu0 0.0
        %898 = vmatpush.xpose.msra.mxu0 0.0
        %899 = vmatpush.xpose.msra.mxu0 %v882
        %900 = vmatmul.f32.gmra.mxu0 %v880
        %v901 = vpop.f32.mrf.mxu0
        %v902 = vadd.f32 0.0, %v901
        %903 = vdwg.mxu0
        %v904 = vmul.f32 %v902, 0.25
        %v905 = vsel %vm676, %v904, -1e+30
        %v906 = vsel %vm706, %v905, -inf
        %907 = vmax.xlane.f32.xlu0 %v906
        %v908 = vpop.xlane.xlu0 %907
        %v909 = vsub.f32 %v905, %v908
        %v910 = vmul.f32 %v909, 1.442695
        %v911 = vpow.pop %v910
        %v912 = vsel %vm706, %v911, 0.0
        %913 = vadd.xlane.f32.xlu0 %v912
        %v914 = vpop.xlane.xlu0 %913
        %v915 = vrcp.pop %v914
        %v916 = vmul.f32 %v911, %v915
        %917 = vrot.lane.b32.xlu0 %v670, 80
        %v918 = vpop.permute.xlu0 %917
        %v921 = vsel %vm706, %v916, 0
        %923 = vmatpush.msra.mxu0 0.0
        %924 = vmatpush.msra.mxu0 0.0
        %925 = vmatpush.msra.mxu0 0.0
        %926 = vmatpush.msra.mxu0 0.0
        %927 = vmatpush.msra.mxu0 0.0
        %928 = vmatpush.msra.mxu0 0.0
        %929 = vmatpush.msra.mxu0 0.0
        %930 = vmatpush.msra.mxu0 0.0
        %931 = vmatpush.msra.mxu0 0.0
        %932 = vmatpush.msra.mxu0 0.0
        %933 = vmatpush.msra.mxu0 0.0
        %934 = vmatpush.msra.mxu0 0.0
        %935 = vmatpush.msra.mxu0 0.0
        %936 = vmatpush.msra.mxu0 0.0
        %937 = vmatpush.msra.mxu0 0.0
        %938 = vmatpush.msra.mxu0 %v918
        %939 = vmatmul.f32.gmra.mxu0 %v921
        %v940 = vpop.f32.mrf.mxu0
        %v941 = vadd.f32 0.0, %v940
        %942 = vdwg.mxu0
        %943 = vrot.lane.b32.xlu0 %v630, 64
        %v944 = vpop.permute.xlu0 %943
        %945 = vrot.lane.b32.xlu0 %v650, 64
        %v946 = vpop.permute.xlu0 %945
        %v947 = vsel %vm677, %v944, 0
        %v949 = vsel %vm677, %v946, 0
        %951 = vmatpush.xpose.msra.mxu0 0.0
        %952 = vmatpush.xpose.msra.mxu0 0.0
        %953 = vmatpush.xpose.msra.mxu0 0.0
        %954 = vmatpush.xpose.msra.mxu0 0.0
        %955 = vmatpush.xpose.msra.mxu0 0.0
        %956 = vmatpush.xpose.msra.mxu0 0.0
        %957 = vmatpush.xpose.msra.mxu0 0.0
        %958 = vmatpush.xpose.msra.mxu0 0.0
        %959 = vmatpush.xpose.msra.mxu0 0.0
        %960 = vmatpush.xpose.msra.mxu0 0.0
        %961 = vmatpush.xpose.msra.mxu0 0.0
        %962 = vmatpush.xpose.msra.mxu0 0.0
        %963 = vmatpush.xpose.msra.mxu0 0.0
        %964 = vmatpush.xpose.msra.mxu0 0.0
        %965 = vmatpush.xpose.msra.mxu0 0.0
        %966 = vmatpush.xpose.msra.mxu0 %v949
        %967 = vmatmul.f32.gmra.mxu0 %v947
        %v968 = vpop.f32.mrf.mxu0
        %v969 = vadd.f32 0.0, %v968
        %970 = vdwg.mxu0
        %v971 = vmul.f32 %v969, 0.25
        %v972 = vsel %vm676, %v971, -1e+30
        %v973 = vsel %vm706, %v972, -inf
        %974 = vmax.xlane.f32.xlu0 %v973
        %v975 = vpop.xlane.xlu0 %974
        %v976 = vsub.f32 %v972, %v975
        %v977 = vmul.f32 %v976, 1.442695
        %v978 = vpow.pop %v977
        %v979 = vsel %vm706, %v978, 0.0
        %980 = vadd.xlane.f32.xlu0 %v979
        %v981 = vpop.xlane.xlu0 %980
        %v982 = vrcp.pop %v981
        %v983 = vmul.f32 %v978, %v982
        %984 = vrot.lane.b32.xlu0 %v670, 64
        %v985 = vpop.permute.xlu0 %984
        %v988 = vsel %vm706, %v983, 0
        %990 = vmatpush.msra.mxu0 0.0
        %991 = vmatpush.msra.mxu0 0.0
        %992 = vmatpush.msra.mxu0 0.0
        %993 = vmatpush.msra.mxu0 0.0
        %994 = vmatpush.msra.mxu0 0.0
        %995 = vmatpush.msra.mxu0 0.0
        %996 = vmatpush.msra.mxu0 0.0
        %997 = vmatpush.msra.mxu0 0.0
        %998 = vmatpush.msra.mxu0 0.0
        %999 = vmatpush.msra.mxu0 0.0
        %1000 = vmatpush.msra.mxu0 0.0
        %1001 = vmatpush.msra.mxu0 0.0
        %1002 = vmatpush.msra.mxu0 0.0
        %1003 = vmatpush.msra.mxu0 0.0
        %1004 = vmatpush.msra.mxu0 0.0
        %1005 = vmatpush.msra.mxu0 %v985
        %1006 = vmatmul.f32.gmra.mxu0 %v988
        %v1007 = vpop.f32.mrf.mxu0
        %v1008 = vadd.f32 0.0, %v1007
        %1009 = vdwg.mxu0
        %1010 = vrot.lane.b32.xlu0 %v630, 48
        %v1011 = vpop.permute.xlu0 %1010
        %1012 = vrot.lane.b32.xlu0 %v650, 48
        %v1013 = vpop.permute.xlu0 %1012
        %v1014 = vsel %vm677, %v1011, 0
        %v1016 = vsel %vm677, %v1013, 0
        %1018 = vmatpush.xpose.msra.mxu0 0.0
        %1019 = vmatpush.xpose.msra.mxu0 0.0
        %1020 = vmatpush.xpose.msra.mxu0 0.0
        %1021 = vmatpush.xpose.msra.mxu0 0.0
        %1022 = vmatpush.xpose.msra.mxu0 0.0
        %1023 = vmatpush.xpose.msra.mxu0 0.0
        %1024 = vmatpush.xpose.msra.mxu0 0.0
        %1025 = vmatpush.xpose.msra.mxu0 0.0
        %1026 = vmatpush.xpose.msra.mxu0 0.0
        %1027 = vmatpush.xpose.msra.mxu0 0.0
        %1028 = vmatpush.xpose.msra.mxu0 0.0
        %1029 = vmatpush.xpose.msra.mxu0 0.0
        %1030 = vmatpush.xpose.msra.mxu0 0.0
        %1031 = vmatpush.xpose.msra.mxu0 0.0
        %1032 = vmatpush.xpose.msra.mxu0 0.0
        %1033 = vmatpush.xpose.msra.mxu0 %v1016
        %1034 = vmatmul.f32.gmra.mxu0 %v1014
        %v1035 = vpop.f32.mrf.mxu0
        %v1036 = vadd.f32 0.0, %v1035
        %1037 = vdwg.mxu0
        %v1038 = vmul.f32 %v1036, 0.25
        %v1039 = vsel %vm676, %v1038, -1e+30
        %v1040 = vsel %vm706, %v1039, -inf
        %1041 = vmax.xlane.f32.xlu0 %v1040
        %v1042 = vpop.xlane.xlu0 %1041
        %v1043 = vsub.f32 %v1039, %v1042
        %v1044 = vmul.f32 %v1043, 1.442695
        %v1045 = vpow.pop %v1044
        %v1046 = vsel %vm706, %v1045, 0.0
        %1047 = vadd.xlane.f32.xlu0 %v1046
        %v1048 = vpop.xlane.xlu0 %1047
        %v1049 = vrcp.pop %v1048
        %v1050 = vmul.f32 %v1045, %v1049
        %1051 = vrot.lane.b32.xlu0 %v670, 48
        %v1052 = vpop.permute.xlu0 %1051
        %v1055 = vsel %vm706, %v1050, 0
        %1057 = vmatpush.msra.mxu0 0.0
        %1058 = vmatpush.msra.mxu0 0.0
        %1059 = vmatpush.msra.mxu0 0.0
        %1060 = vmatpush.msra.mxu0 0.0
        %1061 = vmatpush.msra.mxu0 0.0
        %1062 = vmatpush.msra.mxu0 0.0
        %1063 = vmatpush.msra.mxu0 0.0
        %1064 = vmatpush.msra.mxu0 0.0
        %1065 = vmatpush.msra.mxu0 0.0
        %1066 = vmatpush.msra.mxu0 0.0
        %1067 = vmatpush.msra.mxu0 0.0
        %1068 = vmatpush.msra.mxu0 0.0
        %1069 = vmatpush.msra.mxu0 0.0
        %1070 = vmatpush.msra.mxu0 0.0
        %1071 = vmatpush.msra.mxu0 0.0
        %1072 = vmatpush.msra.mxu0 %v1052
        %1073 = vmatmul.f32.gmra.mxu0 %v1055
        %v1074 = vpop.f32.mrf.mxu0
        %v1075 = vadd.f32 0.0, %v1074
        %1076 = vdwg.mxu0
        %1077 = vrot.lane.b32.xlu0 %v630, 32
        %v1078 = vpop.permute.xlu0 %1077
        %1079 = vrot.lane.b32.xlu0 %v650, 32
        %v1080 = vpop.permute.xlu0 %1079
        %v1081 = vsel %vm677, %v1078, 0
        %v1083 = vsel %vm677, %v1080, 0
        %1085 = vmatpush.xpose.msra.mxu0 0.0
        %1086 = vmatpush.xpose.msra.mxu0 0.0
        %1087 = vmatpush.xpose.msra.mxu0 0.0
        %1088 = vmatpush.xpose.msra.mxu0 0.0
        %1089 = vmatpush.xpose.msra.mxu0 0.0
        %1090 = vmatpush.xpose.msra.mxu0 0.0
        %1091 = vmatpush.xpose.msra.mxu0 0.0
        %1092 = vmatpush.xpose.msra.mxu0 0.0
        %1093 = vmatpush.xpose.msra.mxu0 0.0
        %1094 = vmatpush.xpose.msra.mxu0 0.0
        %1095 = vmatpush.xpose.msra.mxu0 0.0
        %1096 = vmatpush.xpose.msra.mxu0 0.0
        %1097 = vmatpush.xpose.msra.mxu0 0.0
        %1098 = vmatpush.xpose.msra.mxu0 0.0
        %1099 = vmatpush.xpose.msra.mxu0 0.0
        %1100 = vmatpush.xpose.msra.mxu0 %v1083
        %1101 = vmatmul.f32.gmra.mxu0 %v1081
        %v1102 = vpop.f32.mrf.mxu0
        %v1103 = vadd.f32 0.0, %v1102
        %1104 = vdwg.mxu0
        %v1105 = vmul.f32 %v1103, 0.25
        %v1106 = vsel %vm676, %v1105, -1e+30
        %v1107 = vsel %vm706, %v1106, -inf
        %1108 = vmax.xlane.f32.xlu0 %v1107
        %v1109 = vpop.xlane.xlu0 %1108
        %v1110 = vsub.f32 %v1106, %v1109
        %v1111 = vmul.f32 %v1110, 1.442695
        %v1112 = vpow.pop %v1111
        %v1113 = vsel %vm706, %v1112, 0.0
        %1114 = vadd.xlane.f32.xlu0 %v1113
        %v1115 = vpop.xlane.xlu0 %1114
        %v1116 = vrcp.pop %v1115
        %v1117 = vmul.f32 %v1112, %v1116
        %1118 = vrot.lane.b32.xlu0 %v670, 32
        %v1119 = vpop.permute.xlu0 %1118
        %v1122 = vsel %vm706, %v1117, 0
        %1124 = vmatpush.msra.mxu0 0.0
        %1125 = vmatpush.msra.mxu0 0.0
        %1126 = vmatpush.msra.mxu0 0.0
        %1127 = vmatpush.msra.mxu0 0.0
        %1128 = vmatpush.msra.mxu0 0.0
        %1129 = vmatpush.msra.mxu0 0.0
        %1130 = vmatpush.msra.mxu0 0.0
        %1131 = vmatpush.msra.mxu0 0.0
        %1132 = vmatpush.msra.mxu0 0.0
        %1133 = vmatpush.msra.mxu0 0.0
        %1134 = vmatpush.msra.mxu0 0.0
        %1135 = vmatpush.msra.mxu0 0.0
        %1136 = vmatpush.msra.mxu0 0.0
        %1137 = vmatpush.msra.mxu0 0.0
        %1138 = vmatpush.msra.mxu0 0.0
        %1139 = vmatpush.msra.mxu0 %v1119
        %1140 = vmatmul.f32.gmra.mxu0 %v1122
        %v1141 = vpop.f32.mrf.mxu0
        %v1142 = vadd.f32 0.0, %v1141
        %1143 = vdwg.mxu0
        %1144 = vrot.lane.b32.xlu0 %v630, 16
        %v1145 = vpop.permute.xlu0 %1144
        %1146 = vrot.lane.b32.xlu0 %v650, 16
        %v1147 = vpop.permute.xlu0 %1146
        %v1148 = vsel %vm677, %v1145, 0
        %v1150 = vsel %vm677, %v1147, 0
        %1152 = vmatpush.xpose.msra.mxu0 0.0
        %1153 = vmatpush.xpose.msra.mxu0 0.0
        %1154 = vmatpush.xpose.msra.mxu0 0.0
        %1155 = vmatpush.xpose.msra.mxu0 0.0
        %1156 = vmatpush.xpose.msra.mxu0 0.0
        %1157 = vmatpush.xpose.msra.mxu0 0.0
        %1158 = vmatpush.xpose.msra.mxu0 0.0
        %1159 = vmatpush.xpose.msra.mxu0 0.0
        %1160 = vmatpush.xpose.msra.mxu0 0.0
        %1161 = vmatpush.xpose.msra.mxu0 0.0
        %1162 = vmatpush.xpose.msra.mxu0 0.0
        %1163 = vmatpush.xpose.msra.mxu0 0.0
        %1164 = vmatpush.xpose.msra.mxu0 0.0
        %1165 = vmatpush.xpose.msra.mxu0 0.0
        %1166 = vmatpush.xpose.msra.mxu0 0.0
        %1167 = vmatpush.xpose.msra.mxu0 %v1150
        %1168 = vmatmul.f32.gmra.mxu0 %v1148
        %v1169 = vpop.f32.mrf.mxu0
        %v1170 = vadd.f32 0.0, %v1169
        %1171 = vdwg.mxu0
        %v1172 = vmul.f32 %v1170, 0.25
        %v1173 = vsel %vm676, %v1172, -1e+30
        %v1174 = vsel %vm706, %v1173, -inf
        %1175 = vmax.xlane.f32.xlu0 %v1174
        %v1176 = vpop.xlane.xlu0 %1175
        %v1177 = vsub.f32 %v1173, %v1176
        %v1178 = vmul.f32 %v1177, 1.442695
        %v1179 = vpow.pop %v1178
        %v1180 = vsel %vm706, %v1179, 0.0
        %1181 = vadd.xlane.f32.xlu0 %v1180
        %v1182 = vpop.xlane.xlu0 %1181
        %v1183 = vrcp.pop %v1182
        %v1184 = vmul.f32 %v1179, %v1183
        %1185 = vrot.lane.b32.xlu0 %v670, 16
        %v1186 = vpop.permute.xlu0 %1185
        %v1189 = vsel %vm706, %v1184, 0
        %1191 = vmatpush.msra.mxu0 0.0
        %1192 = vmatpush.msra.mxu0 0.0
        %1193 = vmatpush.msra.mxu0 0.0
        %1194 = vmatpush.msra.mxu0 0.0
        %1195 = vmatpush.msra.mxu0 0.0
        %1196 = vmatpush.msra.mxu0 0.0
        %1197 = vmatpush.msra.mxu0 0.0
        %1198 = vmatpush.msra.mxu0 0.0
        %1199 = vmatpush.msra.mxu0 0.0
        %1200 = vmatpush.msra.mxu0 0.0
        %1201 = vmatpush.msra.mxu0 0.0
        %1202 = vmatpush.msra.mxu0 0.0
        %1203 = vmatpush.msra.mxu0 0.0
        %1204 = vmatpush.msra.mxu0 0.0
        %1205 = vmatpush.msra.mxu0 0.0
        %1206 = vmatpush.msra.mxu0 %v1186
        %1207 = vmatmul.f32.gmra.mxu0 %v1189
        %v1208 = vpop.f32.mrf.mxu0
        %v1209 = vadd.f32 0.0, %v1208
        %1210 = vdwg.mxu0
        %1212 = vrot.lane.b32.xlu0 %v807, 16
        %v1213 = vpop.permute.xlu0 %1212
        %1216 = vrot.lane.b32.xlu0 %v874, 32
        %v1217 = vpop.permute.xlu0 %1216
        %1220 = vrot.lane.b32.xlu0 %v941, 48
        %v1221 = vpop.permute.xlu0 %1220
        %1224 = vrot.lane.b32.xlu0 %v1008, 64
        %v1225 = vpop.permute.xlu0 %1224
        %1228 = vrot.lane.b32.xlu0 %v1075, 80
        %v1229 = vpop.permute.xlu0 %1228
        %1232 = vrot.lane.b32.xlu0 %v1142, 96
        %v1233 = vpop.permute.xlu0 %1232
        %1236 = vrot.lane.b32.xlu0 %v1209, 112
        %v1237 = vpop.permute.xlu0 %1236
        %v1239 = vsel %vm677, %v739, %v1213
        %vm1240 = vcmask 261120
        %v1241 = vsel %vm1240, %v1239, %v1217
        %vm1242 = vcmask 392192
        %v1243 = vsel %vm1242, %v1241, %v1221
        %vm1244 = vcmask 523264
        %v1245 = vsel %vm1244, %v1243, %v1225
        %vm1246 = vcmask 654336
        %v1247 = vsel %vm1246, %v1245, %v1229
        %vm1248 = vcmask 785408
        %v1249 = vsel %vm1248, %v1247, %v1233
        %vm1250 = vcmask 916480
        %v1251 = vsel %vm1250, %v1249, %v1237
        %v1252 = vld [vmem:[#allocation8] sm:$0xff]
        %v1253 = vld [vmem:[#allocation8 + $0x8] sm:$0xff]
        %v1254 = vld [vmem:[#allocation8 + $0x10] sm:$0xff]
        %v1255 = vld [vmem:[#allocation8 + $0x18] sm:$0xff]
        %v1256 = vld [vmem:[#allocation8 + $0x20] sm:$0xff]
        %v1257 = vld [vmem:[#allocation8 + $0x28] sm:$0xff]
        %v1258 = vld [vmem:[#allocation8 + $0x30] sm:$0xff]
        %v1259 = vld [vmem:[#allocation8 + $0x38] sm:$0xff]
        %v1260 = vld [vmem:[#allocation8 + $0x40] sm:$0xff]
        %v1261 = vld [vmem:[#allocation8 + $0x48] sm:$0xff]
        %v1262 = vld [vmem:[#allocation8 + $0x50] sm:$0xff]
        %v1263 = vld [vmem:[#allocation8 + $0x58] sm:$0xff]
        %v1264 = vld [vmem:[#allocation8 + $0x60] sm:$0xff]
        %v1265 = vld [vmem:[#allocation8 + $0x68] sm:$0xff]
        %v1266 = vld [vmem:[#allocation8 + $0x70] sm:$0xff]
        %v1267 = vld [vmem:[#allocation8 + $0x78] sm:$0xff]
        %v1268 = vld [vmem:[%s5] sm:$0x1]
        %v1270 = vperm.slane %v1268, 0
        %1272 = vmatpush.msra.mxu0 %v1267
        %1273 = vmatpush.msra.mxu0 %v1266
        %1274 = vmatpush.msra.mxu0 %v1265
        %1275 = vmatpush.msra.mxu0 %v1264
        %1276 = vmatpush.msra.mxu0 %v1263
        %1277 = vmatpush.msra.mxu0 %v1262
        %1278 = vmatpush.msra.mxu0 %v1261
        %1279 = vmatpush.msra.mxu0 %v1260
        %1280 = vmatpush.msra.mxu0 %v1259
        %1281 = vmatpush.msra.mxu0 %v1258
        %1282 = vmatpush.msra.mxu0 %v1257
        %1283 = vmatpush.msra.mxu0 %v1256
        %1284 = vmatpush.msra.mxu0 %v1255
        %1285 = vmatpush.msra.mxu0 %v1254
        %1286 = vmatpush.msra.mxu0 %v1253
        %1287 = vmatpush.msra.mxu0 %v1252
        %1288 = vmatmul.f32.gmra.mxu0 %v1251
        %v1289 = vpop.f32.mrf.mxu0
        %v1290 = vadd.f32 %v1270, %v1289
        %1291 = vdwg.mxu0
        %v1292 = vadd.f32 %v563, %v1290
        %v1293 = vld [vmem:[%s6] sm:$0x1]
        %v1294 = vld [vmem:[#allocation10] sm:$0x1]
        %1295 = vadd.xlane.f32.xlu0 %v1292
        %v1296 = vpop.xlane.xlu0 %1295
        %v1297 = vmul.f32 %v1296, %v537
        %v1298 = vsub.f32 %v1292, %v1297
        %v1299 = vmul.f32 %v1298, %v1298
        %1300 = vadd.xlane.f32.xlu0 %v1299
        %v1301 = vpop.xlane.xlu0 %1300
        %v1302 = vmul.f32 %v1301, %v537
        %v1303 = vadd.f32 %v1302, 1e-05
        %v1304 = vrsqrt.pop %v1303
        %v1305 = vmul.f32 %v1304, %v1303
        %v1306 = vmul.f32 %v1305, %v1304
        %v1307 = vmul.f32 0.5, %v1306
        %v1308 = vsub.f32 1.5, %v1307
        %v1309 = vmul.f32 %v1304, %v1308
        %vm1310 = vweird.f32 %v1303
        %vm1311 = vweird.f32 %v1304
        %vm1312 = vmor %vm1310, %vm1311
        %v1313 = vsel %vm1312, %v1304, %v1309
        %v1314 = vmul.f32 %v1298, %v1313
        %v1316 = vperm.slane %v1293, 0
        %v1318 = vmul.f32 %v1314, %v1316
        %v1320 = vperm.slane %v1294, 0
        %v1322 = vadd.f32 %v1318, %v1320
        %v1323 = vld [vmem:[#allocation11] sm:$0xff]
        %v1324 = vld [vmem:[#allocation11 + $0x8] sm:$0xff]
        %v1325 = vld [vmem:[#allocation11 + $0x10] sm:$0xff]
        %v1326 = vld [vmem:[#allocation11 + $0x18] sm:$0xff]
        %v1327 = vld [vmem:[#allocation11 + $0x20] sm:$0xff]
        %v1328 = vld [vmem:[#allocation11 + $0x28] sm:$0xff]
        %v1329 = vld [vmem:[#allocation11 + $0x30] sm:$0xff]
        %v1330 = vld [vmem:[#allocation11 + $0x38] sm:$0xff]
        %v1331 = vld [vmem:[#allocation11 + $0x40] sm:$0xff]
        %v1332 = vld [vmem:[#allocation11 + $0x48] sm:$0xff]
        %v1333 = vld [vmem:[#allocation11 + $0x50] sm:$0xff]
        %v1334 = vld [vmem:[#allocation11 + $0x58] sm:$0xff]
        %v1335 = vld [vmem:[#allocation11 + $0x60] sm:$0xff]
        %v1336 = vld [vmem:[#allocation11 + $0x68] sm:$0xff]
        %v1337 = vld [vmem:[#allocation11 + $0x70] sm:$0xff]
        %v1338 = vld [vmem:[#allocation11 + $0x78] sm:$0xff]
        %v1339 = vld [vmem:[#allocation11 + $0x80] sm:$0xff]
        %v1340 = vld [vmem:[#allocation11 + $0x88] sm:$0xff]
        %v1341 = vld [vmem:[#allocation11 + $0x90] sm:$0xff]
        %v1342 = vld [vmem:[#allocation11 + $0x98] sm:$0xff]
        %v1343 = vld [vmem:[#allocation11 + $0xa0] sm:$0xff]
        %v1344 = vld [vmem:[#allocation11 + $0xa8] sm:$0xff]
        %v1345 = vld [vmem:[#allocation11 + $0xb0] sm:$0xff]
        %v1346 = vld [vmem:[#allocation11 + $0xb8] sm:$0xff]
        %v1347 = vld [vmem:[#allocation11 + $0xc0] sm:$0xff]
        %v1348 = vld [vmem:[#allocation11 + $0xc8] sm:$0xff]
        %v1349 = vld [vmem:[#allocation11 + $0xd0] sm:$0xff]
        %v1350 = vld [vmem:[#allocation11 + $0xd8] sm:$0xff]
        %v1351 = vld [vmem:[#allocation11 + $0xe0] sm:$0xff]
        %v1352 = vld [vmem:[#allocation11 + $0xe8] sm:$0xff]
        %v1353 = vld [vmem:[#allocation11 + $0xf0] sm:$0xff]
        %v1354 = vld [vmem:[#allocation11 + $0xf8] sm:$0xff]
        %v1355 = vld [vmem:[#allocation11 + $0x100] sm:$0xff]
        %v1356 = vld [vmem:[#allocation11 + $0x108] sm:$0xff]
        %v1357 = vld [vmem:[#allocation11 + $0x110] sm:$0xff]
        %v1358 = vld [vmem:[#allocation11 + $0x118] sm:$0xff]
        %v1359 = vld [vmem:[#allocation11 + $0x120] sm:$0xff]
        %v1360 = vld [vmem:[#allocation11 + $0x128] sm:$0xff]
        %v1361 = vld [vmem:[#allocation11 + $0x130] sm:$0xff]
        %v1362 = vld [vmem:[#allocation11 + $0x138] sm:$0xff]
        %v1363 = vld [vmem:[#allocation11 + $0x140] sm:$0xff]
        %v1364 = vld [vmem:[#allocation11 + $0x148] sm:$0xff]
        %v1365 = vld [vmem:[#allocation11 + $0x150] sm:$0xff]
        %v1366 = vld [vmem:[#allocation11 + $0x158] sm:$0xff]
        %v1367 = vld [vmem:[#allocation11 + $0x160] sm:$0xff]
        %v1368 = vld [vmem:[#allocation11 + $0x168] sm:$0xff]
        %v1369 = vld [vmem:[#allocation11 + $0x170] sm:$0xff]
        %v1370 = vld [vmem:[#allocation11 + $0x178] sm:$0xff]
        %v1371 = vld [vmem:[#allocation11 + $0x180] sm:$0xff]
        %v1372 = vld [vmem:[#allocation11 + $0x188] sm:$0xff]
        %v1373 = vld [vmem:[#allocation11 + $0x190] sm:$0xff]
        %v1374 = vld [vmem:[#allocation11 + $0x198] sm:$0xff]
        %v1375 = vld [vmem:[#allocation11 + $0x1a0] sm:$0xff]
        %v1376 = vld [vmem:[#allocation11 + $0x1a8] sm:$0xff]
        %v1377 = vld [vmem:[#allocation11 + $0x1b0] sm:$0xff]
        %v1378 = vld [vmem:[#allocation11 + $0x1b8] sm:$0xff]
        %v1379 = vld [vmem:[#allocation11 + $0x1c0] sm:$0xff]
        %v1380 = vld [vmem:[#allocation11 + $0x1c8] sm:$0xff]
        %v1381 = vld [vmem:[#allocation11 + $0x1d0] sm:$0xff]
        %v1382 = vld [vmem:[#allocation11 + $0x1d8] sm:$0xff]
        %v1383 = vld [vmem:[#allocation11 + $0x1e0] sm:$0xff]
        %v1384 = vld [vmem:[#allocation11 + $0x1e8] sm:$0xff]
        %v1385 = vld [vmem:[#allocation11 + $0x1f0] sm:$0xff]
        %v1386 = vld [vmem:[#allocation11 + $0x1f8] sm:$0xff]
        %v1387 = vld [vmem:[%s9] sm:$0xf]
        %v1389 = vperm.slane %v1387, 0
        %v1390 = vperm.slane %v1387, 1
        %v1391 = vperm.slane %v1387, 2
        %v1392 = vperm.slane %v1387, 3
        %1397 = vmatpush.msra.mxu0 %v1383
        %1398 = vmatpush.msra.mxu0 %v1379
        %1399 = vmatpush.msra.mxu0 %v1375
        %1400 = vmatpush.msra.mxu0 %v1371
        %1401 = vmatpush.msra.mxu0 %v1367
        %1402 = vmatpush.msra.mxu0 %v1363
        %1403 = vmatpush.msra.mxu0 %v1359
        %1404 = vmatpush.msra.mxu0 %v1355
        %1405 = vmatpush.msra.mxu0 %v1351
        %1406 = vmatpush.msra.mxu0 %v1347
        %1407 = vmatpush.msra.mxu0 %v1343
        %1408 = vmatpush.msra.mxu0 %v1339
        %1409 = vmatpush.msra.mxu0 %v1335
        %1410 = vmatpush.msra.mxu0 %v1331
        %1411 = vmatpush.msra.mxu0 %v1327
        %1412 = vmatpush.msra.mxu0 %v1323
        %1413 = vmatmul.f32.gmra.mxu0 %v1322
        %v1414 = vpop.f32.mrf.mxu0
        %v1415 = vadd.f32 %v1389, %v1414
        %1416 = vdwg.mxu0
        %1417 = vmatpush.msra.mxu0 %v1384
        %1418 = vmatpush.msra.mxu0 %v1380
        %1419 = vmatpush.msra.mxu0 %v1376
        %1420 = vmatpush.msra.mxu0 %v1372
        %1421 = vmatpush.msra.mxu0 %v1368
        %1422 = vmatpush.msra.mxu0 %v1364
        %1423 = vmatpush.msra.mxu0 %v1360
        %1424 = vmatpush.msra.mxu0 %v1356
        %1425 = vmatpush.msra.mxu0 %v1352
        %1426 = vmatpush.msra.mxu0 %v1348
        %1427 = vmatpush.msra.mxu0 %v1344
        %1428 = vmatpush.msra.mxu0 %v1340
        %1429 = vmatpush.msra.mxu0 %v1336
        %1430 = vmatpush.msra.mxu0 %v1332
        %1431 = vmatpush.msra.mxu0 %v1328
        %1432 = vmatpush.msra.mxu0 %v1324
        %1433 = vmatmul.f32.gmra.mxu0 %v1322
        %v1434 = vpop.f32.mrf.mxu0
        %v1435 = vadd.f32 %v1390, %v1434
        %1436 = vdwg.mxu0
        %1437 = vmatpush.msra.mxu0 %v1385
        %1438 = vmatpush.msra.mxu0 %v1381
        %1439 = vmatpush.msra.mxu0 %v1377
        %1440 = vmatpush.msra.mxu0 %v1373
        %1441 = vmatpush.msra.mxu0 %v1369
        %1442 = vmatpush.msra.mxu0 %v1365
        %1443 = vmatpush.msra.mxu0 %v1361
        %1444 = vmatpush.msra.mxu0 %v1357
        %1445 = vmatpush.msra.mxu0 %v1353
        %1446 = vmatpush.msra.mxu0 %v1349
        %1447 = vmatpush.msra.mxu0 %v1345
        %1448 = vmatpush.msra.mxu0 %v1341
        %1449 = vmatpush.msra.mxu0 %v1337
        %1450 = vmatpush.msra.mxu0 %v1333
        %1451 = vmatpush.msra.mxu0 %v1329
        %1452 = vmatpush.msra.mxu0 %v1325
        %1453 = vmatmul.f32.gmra.mxu0 %v1322
        %v1454 = vpop.f32.mrf.mxu0
        %v1455 = vadd.f32 %v1391, %v1454
        %1456 = vdwg.mxu0
        %1457 = vmatpush.msra.mxu0 %v1386
        %1458 = vmatpush.msra.mxu0 %v1382
        %1459 = vmatpush.msra.mxu0 %v1378
        %1460 = vmatpush.msra.mxu0 %v1374
        %1461 = vmatpush.msra.mxu0 %v1370
        %1462 = vmatpush.msra.mxu0 %v1366
        %1463 = vmatpush.msra.mxu0 %v1362
        %1464 = vmatpush.msra.mxu0 %v1358
        %1465 = vmatpush.msra.mxu0 %v1354
        %1466 = vmatpush.msra.mxu0 %v1350
        %1467 = vmatpush.msra.mxu0 %v1346
        %1468 = vmatpush.msra.mxu0 %v1342
        %1469 = vmatpush.msra.mxu0 %v1338
        %1470 = vmatpush.msra.mxu0 %v1334
        %1471 = vmatpush.msra.mxu0 %v1330
        %1472 = vmatpush.msra.mxu0 %v1326
        %1473 = vmatmul.f32.gmra.mxu0 %v1322
        %v1474 = vpop.f32.mrf.mxu0
        %v1475 = vadd.f32 %v1392, %v1474
        %1476 = vdwg.mxu0
        %v1477 = vmax.f32 %v1415, 0.0
        %v1478 = vmax.f32 %v1435, 0.0
        %v1479 = vmax.f32 %v1455, 0.0
        %v1480 = vmax.f32 %v1475, 0.0
        %v1481 = vld [vmem:[#allocation13] sm:$0xff]
        %v1482 = vld [vmem:[#allocation13 + $0x8] sm:$0xff]
        %v1483 = vld [vmem:[#allocation13 + $0x10] sm:$0xff]
        %v1484 = vld [vmem:[#allocation13 + $0x18] sm:$0xff]
        %v1485 = vld [vmem:[#allocation13 + $0x20] sm:$0xff]
        %v1486 = vld [vmem:[#allocation13 + $0x28] sm:$0xff]
        %v1487 = vld [vmem:[#allocation13 + $0x30] sm:$0xff]
        %v1488 = vld [vmem:[#allocation13 + $0x38] sm:$0xff]
        %v1489 = vld [vmem:[#allocation13 + $0x40] sm:$0xff]
        %v1490 = vld [vmem:[#allocation13 + $0x48] sm:$0xff]
        %v1491 = vld [vmem:[#allocation13 + $0x50] sm:$0xff]
        %v1492 = vld [vmem:[#allocation13 + $0x58] sm:$0xff]
        %v1493 = vld [vmem:[#allocation13 + $0x60] sm:$0xff]
        %v1494 = vld [vmem:[#allocation13 + $0x68] sm:$0xff]
        %v1495 = vld [vmem:[#allocation13 + $0x70] sm:$0xff]
        %v1496 = vld [vmem:[#allocation13 + $0x78] sm:$0xff]
        %v1497 = vld [vmem:[#allocation13 + $0x80] sm:$0xff]
        %v1498 = vld [vmem:[#allocation13 + $0x88] sm:$0xff]
        %v1499 = vld [vmem:[#allocation13 + $0x90] sm:$0xff]
        %v1500 = vld [vmem:[#allocation13 + $0x98] sm:$0xff]
        %v1501 = vld [vmem:[#allocation13 + $0xa0] sm:$0xff]
        %v1502 = vld [vmem:[#allocation13 + $0xa8] sm:$0xff]
        %v1503 = vld [vmem:[#allocation13 + $0xb0] sm:$0xff]
        %v1504 = vld [vmem:[#allocation13 + $0xb8] sm:$0xff]
        %v1505 = vld [vmem:[#allocation13 + $0xc0] sm:$0xff]
        %v1506 = vld [vmem:[#allocation13 + $0xc8] sm:$0xff]
        %v1507 = vld [vmem:[#allocation13 + $0xd0] sm:$0xff]
        %v1508 = vld [vmem:[#allocation13 + $0xd8] sm:$0xff]
        %v1509 = vld [vmem:[#allocation13 + $0xe0] sm:$0xff]
        %v1510 = vld [vmem:[#allocation13 + $0xe8] sm:$0xff]
        %v1511 = vld [vmem:[#allocation13 + $0xf0] sm:$0xff]
        %v1512 = vld [vmem:[#allocation13 + $0xf8] sm:$0xff]
        %v1513 = vld [vmem:[#allocation13 + $0x100] sm:$0xff]
        %v1514 = vld [vmem:[#allocation13 + $0x108] sm:$0xff]
        %v1515 = vld [vmem:[#allocation13 + $0x110] sm:$0xff]
        %v1516 = vld [vmem:[#allocation13 + $0x118] sm:$0xff]
        %v1517 = vld [vmem:[#allocation13 + $0x120] sm:$0xff]
        %v1518 = vld [vmem:[#allocation13 + $0x128] sm:$0xff]
        %v1519 = vld [vmem:[#allocation13 + $0x130] sm:$0xff]
        %v1520 = vld [vmem:[#allocation13 + $0x138] sm:$0xff]
        %v1521 = vld [vmem:[#allocation13 + $0x140] sm:$0xff]
        %v1522 = vld [vmem:[#allocation13 + $0x148] sm:$0xff]
        %v1523 = vld [vmem:[#allocation13 + $0x150] sm:$0xff]
        %v1524 = vld [vmem:[#allocation13 + $0x158] sm:$0xff]
        %v1525 = vld [vmem:[#allocation13 + $0x160] sm:$0xff]
        %v1526 = vld [vmem:[#allocation13 + $0x168] sm:$0xff]
        %v1527 = vld [vmem:[#allocation13 + $0x170] sm:$0xff]
        %v1528 = vld [vmem:[#allocation13 + $0x178] sm:$0xff]
        %v1529 = vld [vmem:[#allocation13 + $0x180] sm:$0xff]
        %v1530 = vld [vmem:[#allocation13 + $0x188] sm:$0xff]
        %v1531 = vld [vmem:[#allocation13 + $0x190] sm:$0xff]
        %v1532 = vld [vmem:[#allocation13 + $0x198] sm:$0xff]
        %v1533 = vld [vmem:[#allocation13 + $0x1a0] sm:$0xff]
        %v1534 = vld [vmem:[#allocation13 + $0x1a8] sm:$0xff]
        %v1535 = vld [vmem:[#allocation13 + $0x1b0] sm:$0xff]
        %v1536 = vld [vmem:[#allocation13 + $0x1b8] sm:$0xff]
        %v1537 = vld [vmem:[#allocation13 + $0x1c0] sm:$0xff]
        %v1538 = vld [vmem:[#allocation13 + $0x1c8] sm:$0xff]
        %v1539 = vld [vmem:[#allocation13 + $0x1d0] sm:$0xff]
        %v1540 = vld [vmem:[#allocation13 + $0x1d8] sm:$0xff]
        %v1541 = vld [vmem:[#allocation13 + $0x1e0] sm:$0xff]
        %v1542 = vld [vmem:[#allocation13 + $0x1e8] sm:$0xff]
        %v1543 = vld [vmem:[#allocation13 + $0x1f0] sm:$0xff]
        %v1544 = vld [vmem:[#allocation13 + $0x1f8] sm:$0xff]
        %v1545 = vld [vmem:[%s11] sm:$0x1]
        %v1547 = vperm.slane %v1545, 0
        %1549 = vmatpush.msra.mxu0 %v1496
        %1550 = vmatpush.msra.mxu0 %v1495
        %1551 = vmatpush.msra.mxu0 %v1494
        %1552 = vmatpush.msra.mxu0 %v1493
        %1553 = vmatpush.msra.mxu0 %v1492
        %1554 = vmatpush.msra.mxu0 %v1491
        %1555 = vmatpush.msra.mxu0 %v1490
        %1556 = vmatpush.msra.mxu0 %v1489
        %1557 = vmatpush.msra.mxu0 %v1488
        %1558 = vmatpush.msra.mxu0 %v1487
        %1559 = vmatpush.msra.mxu0 %v1486
        %1560 = vmatpush.msra.mxu0 %v1485
        %1561 = vmatpush.msra.mxu0 %v1484
        %1562 = vmatpush.msra.mxu0 %v1483
        %1563 = vmatpush.msra.mxu0 %v1482
        %1564 = vmatpush.msra.mxu0 %v1481
        %1565 = vmatmul.f32.gmra.mxu0 %v1477
        %v1566 = vpop.f32.mrf.mxu0
        %v1567 = vadd.f32 %v1547, %v1566
        %1568 = vdwg.mxu0
        %1569 = vmatpush.msra.mxu0 %v1512
        %1570 = vmatpush.msra.mxu0 %v1511
        %1571 = vmatpush.msra.mxu0 %v1510
        %1572 = vmatpush.msra.mxu0 %v1509
        %1573 = vmatpush.msra.mxu0 %v1508
        %1574 = vmatpush.msra.mxu0 %v1507
        %1575 = vmatpush.msra.mxu0 %v1506
        %1576 = vmatpush.msra.mxu0 %v1505
        %1577 = vmatpush.msra.mxu0 %v1504
        %1578 = vmatpush.msra.mxu0 %v1503
        %1579 = vmatpush.msra.mxu0 %v1502
        %1580 = vmatpush.msra.mxu0 %v1501
        %1581 = vmatpush.msra.mxu0 %v1500
        %1582 = vmatpush.msra.mxu0 %v1499
        %1583 = vmatpush.msra.mxu0 %v1498
        %1584 = vmatpush.msra.mxu0 %v1497
        %1585 = vmatmul.f32.gmra.mxu0 %v1478
        %v1586 = vpop.f32.mrf.mxu0
        %v1587 = vadd.f32 %v1567, %v1586
        %1588 = vdwg.mxu0
        %1589 = vmatpush.msra.mxu0 %v1528
        %1590 = vmatpush.msra.mxu0 %v1527
        %1591 = vmatpush.msra.mxu0 %v1526
        %1592 = vmatpush.msra.mxu0 %v1525
        %1593 = vmatpush.msra.mxu0 %v1524
        %1594 = vmatpush.msra.mxu0 %v1523
        %1595 = vmatpush.msra.mxu0 %v1522
        %1596 = vmatpush.msra.mxu0 %v1521
        %1597 = vmatpush.msra.mxu0 %v1520
        %1598 = vmatpush.msra.mxu0 %v1519
        %1599 = vmatpush.msra.mxu0 %v1518
        %1600 = vmatpush.msra.mxu0 %v1517
        %1601 = vmatpush.msra.mxu0 %v1516
        %1602 = vmatpush.msra.mxu0 %v1515
        %1603 = vmatpush.msra.mxu0 %v1514
        %1604 = vmatpush.msra.mxu0 %v1513
        %1605 = vmatmul.f32.gmra.mxu0 %v1479
        %v1606 = vpop.f32.mrf.mxu0
        %v1607 = vadd.f32 %v1587, %v1606
        %1608 = vdwg.mxu0
        %1609 = vmatpush.msra.mxu0 %v1544
        %1610 = vmatpush.msra.mxu0 %v1543
        %1611 = vmatpush.msra.mxu0 %v1542
        %1612 = vmatpush.msra.mxu0 %v1541
        %1613 = vmatpush.msra.mxu0 %v1540
        %1614 = vmatpush.msra.mxu0 %v1539
        %1615 = vmatpush.msra.mxu0 %v1538
        %1616 = vmatpush.msra.mxu0 %v1537
        %1617 = vmatpush.msra.mxu0 %v1536
        %1618 = vmatpush.msra.mxu0 %v1535
        %1619 = vmatpush.msra.mxu0 %v1534
        %1620 = vmatpush.msra.mxu0 %v1533
        %1621 = vmatpush.msra.mxu0 %v1532
        %1622 = vmatpush.msra.mxu0 %v1531
        %1623 = vmatpush.msra.mxu0 %v1530
        %1624 = vmatpush.msra.mxu0 %v1529
        %1625 = vmatmul.f32.gmra.mxu0 %v1480
        %v1626 = vpop.f32.mrf.mxu0
        %v1627 = vadd.f32 %v1607, %v1626
        %1628 = vdwg.mxu0
        %v1629 = vadd.f32 %v1322, %v1627
        %1630 = vst [vmem:[%s525] sm:$0xff] %v1629
        %s1631 = sand.u32 %s297, 1
        %s1632 = scalar_lea.sflag [#allocation4], %s1631
        %s1633 = sand.u32 %s297, 1
        %s1634 = smul.addr %s1633, 8
        %s1635 = scalar_lea.vmem [#allocation14], %s1634
        // Predicated region
        $region97: #{tpu_custom_call.1} parent=67 // pred_check
          %p1636 = pneg %p307
        $region98: #{tpu_custom_call.1} parent=67 // pred_check_branch
          %1638 = sbr.rel (%p1636) target = $region100
        $region99: #{tpu_custom_call.1} parent=67 // pred_region
          %1640 = vsyncadd %s1632, 0
          %s1641 = smul.addr %s32, 8
          %s1642 = scalar_lea.hbm %s12, %s1641
          %s1644 = sshll.u32 %s1635, 4
          %s1645 = int_to_ptr.vmem [resolvable:$true] %s1644
          %s1646 = sshll.u32 %s1642, 4
          %s1647 = int_to_ptr.hbm [resolvable:$true] %s1646
          %1649 = dma.vmem_to_hbm [thread:$0]  %s1645, 128, %s1647, %s1632
        $region100: #{tpu_custom_call.1} parent=67 // pred_fallthru
          _
      $region68: #{tpu_custom_call.1} parent=5 // pred_fallthru
        _
      %p1650 = scmp.le.s32.totalorder 2, %s27
      // Predicated region
      $region101: #{tpu_custom_call.1} parent=5 // pred_check
        %p1651 = pneg %p1650
      $region102: #{tpu_custom_call.1} parent=5 // pred_check_branch
        %1653 = sbr.rel (%p1651) target = $region104
      $region103: #{tpu_custom_call.1} parent=5 // pred_region
        %s1654 = ssub.s32 %s27, 2
        // Predicated region
        $region105: #{tpu_custom_call.1} parent=103 // pred_check
          %p1655 = pneg %p313
        $region106: #{tpu_custom_call.1} parent=103 // pred_check_branch
          %1657 = sbr.rel (%p1655) target = $region108
        $region107: #{tpu_custom_call.1} parent=103 // pred_region
          %s1658 = sand.u32 %s298, 1
          %s1659 = scalar_lea.sflag [#allocation4], %s1658
          %s1660 = sand.u32 %s298, 1
          %s1661 = smul.addr %s1660, 8
          %s1662 = scalar_lea.vmem [#allocation14], %s1661
          %1664 = dma.done %s1659, 128
        $region108: #{tpu_custom_call.1} parent=103 // pred_fallthru
          _
      $region104: #{tpu_custom_call.1} parent=5 // pred_fallthru
        _
    $region6: #{tpu_custom_call.1} parent=1 // loop_footer
      %s31 = sadd.s32 1, %s27
    $region7: #{tpu_custom_call.1} parent=1 // loop_footer_branch
      %26 = sbr.rel target = $region3
    $region8: #{tpu_custom_call.1} parent=1 // loop_exit
      _
    %1665 = vsyncpa [#allocation3], 1
    %s1666 = scalar_lea.sflag [#allocation3], 1
    %1667 = vsyncpa %s1666, 1
    %1668 = vsyncpa [#allocation6], 1
    %1669 = vsyncpa [#allocation9], 1
    %1670 = vsyncpa [#allocation12], 1
    %1671 = vsyncpa [#allocation4], 1
    %s1672 = scalar_lea.sflag [#allocation4], 1
    %1673 = vsyncpa %s1672, 1

</llo_original>
